<compile_context>
chip_gen: v7x
topology: tpu7x:2x2x1
jax: 0.10.0
libtpu: 0.0.40
codegen_flags: <defaults>
</compile_context>

<pallas_src>
import functools

import jax
import jax.numpy as jnp
from jax import lax
from jax.experimental import pallas as pl
from jax.experimental.pallas import tpu as pltpu


def _sttn_kernel(ks_ref, coords_ref, x_ref, o_ref, acc_ref, *, C, T, H, W, tk, tile):
    # ks_ref:     (N, n_tiles) int32 SMEM -- first K chunk for each (batch, pixel-tile)
    # coords_ref: (1, 3, tile)            -- rows: xf, yf, zf (unnormalized sample coords)
    # x_ref:      (1, C*T, tk)            -- one K chunk of flattened source pixels
    # o_ref:      (1, C, tile)
    # acc_ref:    (C*T, tile) f32 scratch accumulated across the K grid axis
    n = pl.program_id(0)
    p = pl.program_id(1)
    k = pl.program_id(2)

    @pl.when(k == 0)
    def _():
        acc_ref[...] = jnp.zeros_like(acc_ref)

    coords = coords_ref[0].astype(jnp.float32)          # (3, tile)
    xf = coords[0:1]                                     # (1, tile)
    yf = coords[1:2]

    x0f = jnp.floor(xf)
    y0f = jnp.floor(yf)
    tx = xf - x0f
    ty = yf - y0f
    x0 = x0f.astype(jnp.int32)
    y0 = y0f.astype(jnp.int32)

    # Flat spatial index of the first row of this K chunk (band-limited window start).
    row0 = (ks_ref[n, p] + k) * tk
    col = row0 + lax.broadcasted_iota(jnp.int32, (tk, tile), 0)

    # Spatial bilinear one-hot chunk: S[r, q] = weight of source pixel (row0 + r) for output
    # pixel q.  Zeros padding: OOB corners get weight 0 *before* the compare, so an OOB xc
    # that aliases into a neighbouring row's flat index adds exactly 0.  Corners never share
    # a flat index with non-zero weight, so the add-accumulate form is safe.
    S = None
    for dy in (0, 1):
        wy = ty if dy else 1.0 - ty
        yc = y0 + dy
        iny = (yc >= 0) & (yc < H)
        for dx in (0, 1):
            wx = tx if dx else 1.0 - tx
            xc = x0 + dx
            inb = iny & (xc >= 0) & (xc < W)
            wgt = jnp.where(inb, wy * wx, 0.0)           # (1, tile)
            flat = yc * W + xc                           # (1, tile)
            contrib = jnp.where(col == flat, wgt, 0.0)   # (tk, tile), 3 VALU ops/corner
            S = contrib if S is None else S + contrib

    x_k = x_ref[0]                                       # (C*T, tk), native dtype
    if x_k.dtype != jnp.float32:
        S = S.astype(x_k.dtype)                          # bf16 inputs: MXU native rate
    acc_ref[...] += jnp.dot(x_k, S, preferred_element_type=jnp.float32)

    @pl.when(k == pl.num_programs(2) - 1)
    def _():
        CT = C * T
        zf = coords[2:3]
        z0f = jnp.floor(zf)
        tz = zf - z0f
        z0 = z0f.astype(jnp.int32)
        # Temporal linear weights.  Zeros padding: zc == -1 or zc == T never matches
        # col_t in [0, T), so the out-of-range corner weight is dropped (do not change
        # this implicit masking when refactoring).
        col_t = lax.broadcasted_iota(jnp.int32, (T, tile), 0)
        Wz = jnp.where(col_t == z0, 1.0 - tz, 0.0)
        Wz = Wz + jnp.where(col_t == z0 + 1, tz, 0.0)    # (T, tile)

        # Rows of acc are ordered c*T + t -> replicate Wz per channel, then group-sum the
        # T rows of each channel with a tiny constant matmul (layout-safe for any T; the
        # MXU is idle in this epilogue anyway).
        weighted = acc_ref[...] * jnp.concatenate([Wz] * C, axis=0)   # (C*T, tile)
        rows = lax.broadcasted_iota(jnp.int32, (C, CT), 1)
        chan = lax.broadcasted_iota(jnp.int32, (C, CT), 0)
        G = ((rows >= chan * T) & (rows < (chan + 1) * T)).astype(jnp.float32)
        out = jnp.dot(G, weighted, preferred_element_type=jnp.float32)  # (C, tile)
        o_ref[0] = out.astype(o_ref.dtype)


def _pick_size(hw_p, cap):
    t = cap
    while t > 128 and hw_p % t != 0:
        t //= 2
    return t


def sttn_forward(inputs, d, u, v, normalized=False, *, tile=None, tk=None):
    """STTN forward. inputs: (N, C, T, H, W); d, u, v: (N, H, W). Returns (N, C, 1, H, W)."""
    N, C, T, H, W = inputs.shape
    HW = H * W
    CT = C * T

    # ---- host-side per-pixel sample coordinates (tiny XLA op over (N, 3, HW); hoists all
    # iota / div / mod / normalization work out of the VALU-bound kernel and packs the three
    # flow fields into a single DMA).
    d32 = d.astype(jnp.float32).reshape(N, H, W)
    u32 = u.astype(jnp.float32).reshape(N, H, W)
    v32 = v.astype(jnp.float32).reshape(N, H, W)
    if not normalized:
        d32 = d32 * (2.0 / T)
        u32 = u32 * (2.0 / W)
        v32 = v32 * (2.0 / H)
    if W > 1:
        gx = 2.0 * jnp.arange(W, dtype=jnp.float32) / (W - 1) - 1.0
    else:
        gx = jnp.full((W,), -1.0, jnp.float32)
    if H > 1:
        gy = 2.0 * jnp.arange(H, dtype=jnp.float32) / (H - 1) - 1.0
    else:
        gy = jnp.full((H,), -1.0, jnp.float32)
    ix = gx[None, None, :] + u32
    iy = gy[None, :, None] + v32
    iz = d32 - 1.0                          # only output temporal slice 0 is kept (z base = -1)
    # grid_sample unnormalize (align_corners=False): ((coord + 1) * size - 1) / 2
    xf = ((ix + 1.0) * W - 1.0) * 0.5
    yf = ((iy + 1.0) * H - 1.0) * 0.5
    zf = ((iz + 1.0) * T - 1.0) * 0.5
    coords = jnp.stack([xf, yf, zf], axis=1).reshape(N, 3, HW)

    x = inputs.reshape(N, CT, HW)           # native dtype end-to-end

    # ---- lane-dense padding + tile / K-chunk sizes (bounded VMEM on every generation).
    HW_p = -(-HW // 128) * 128
    if tile is None:
        tile = _pick_size(HW_p, 1024)
        if N == 1:                          # keep >= 2 parallel programs (v7x has 2 TCs)
            while tile > 128 and HW_p // tile < 2:
                tile //= 2
    if tk is None:
        tk = _pick_size(HW_p, 512)
    assert HW_p % tile == 0 and HW_p % tk == 0
    n_tiles = HW_p // tile
    total_chunks = HW_p // tk

    if HW_p != HW:
        pad = HW_p - HW
        x = jnp.pad(x, ((0, 0), (0, 0), (0, pad)))
        coords = jnp.pad(coords, ((0, 0), (0, 0), (0, pad)), mode="edge")

    # ---- band-limited K window per (batch, pixel-tile): only source rows in
    # [min(y0), max(y0)+1] can carry non-zero bilinear weight.  Window start is clamped so
    # the fixed-size window stays in range and never revisits a chunk (extra in-window
    # chunks contribute exactly 0).
    y0 = jnp.floor(coords[:, 1, :].reshape(N, n_tiles, tile)).astype(jnp.int32)
    ylo = jnp.clip(jnp.min(y0, axis=-1), 0, H - 1)
    yhi = jnp.clip(jnp.max(y0, axis=-1) + 1, 0, H - 1)
    lo_chunk = (ylo * W) // tk
    hi_chunk = ((yhi + 1) * W - 1) // tk
    # NOTE: nk (grid extent) is data-dependent, so this wrapper is not jit-able as written.
    nk = int(jnp.max(hi_chunk - lo_chunk + 1))
    nk = max(1, min(nk, total_chunks))
    kstart = jnp.clip(lo_chunk, 0, total_chunks - nk).astype(jnp.int32)   # (N, n_tiles)

    kernel = functools.partial(_sttn_kernel, C=C, T=T, H=H, W=W, tk=tk, tile=tile)
    out = pl.pallas_call(
        kernel,
        out_shape=jax.ShapeDtypeStruct((N, C, HW_p), inputs.dtype),
        grid_spec=pltpu.PrefetchScalarGridSpec(
            num_scalar_prefetch=1,
            grid=(N, n_tiles, nk),
            in_specs=[
                pl.BlockSpec((1, 3, tile), lambda n, p, k, ks: (n, 0, p)),
                pl.BlockSpec((1, CT, tk), lambda n, p, k, ks: (n, 0, ks[n, p] + k)),
            ],
            out_specs=pl.BlockSpec((1, C, tile), lambda n, p, k, ks: (n, 0, p)),
            scratch_shapes=[pltpu.VMEM((CT, tile), jnp.float32)],
        ),
        compiler_params=pltpu.CompilerParams(
            dimension_semantics=("parallel", "parallel", "arbitrary"),
            vmem_limit_bytes=32 * 1024 * 1024,
        ),
    )(kstart, coords, x)
    return out[:, :, :HW].reshape(N, C, 1, H, W)


def sttn_reference(inputs, d, u, v, normalized=False):
    """Pure-JAX reference (torch grid_sample trilinear / zeros / align_corners=False)."""
    inputs = inputs.astype(jnp.float32)
    N, C, T, H, W = inputs.shape
    d = d.astype(jnp.float32)
    u = u.astype(jnp.float32)
    v = v.astype(jnp.float32)
    if not normalized:
        d = d / T * 2.0
        u = u / W * 2.0
        v = v / H * 2.0
    if W > 1:
        gx = (2.0 * jnp.arange(W, dtype=jnp.float32) / (W - 1) - 1.0)[None, None, :]
    else:
        gx = jnp.full((1, 1, W), -1.0, jnp.float32)
    if H > 1:
        gy = (2.0 * jnp.arange(H, dtype=jnp.float32) / (H - 1) - 1.0)[None, :, None]
    else:
        gy = jnp.full((1, H, 1), -1.0, jnp.float32)
    ix, iy, iz = gx + u, gy + v, -1.0 + d
    xf = ((ix + 1.0) * W - 1.0) * 0.5
    yf = ((iy + 1.0) * H - 1.0) * 0.5
    zf = ((iz + 1.0) * T - 1.0) * 0.5
    x0f, y0f, z0f = jnp.floor(xf), jnp.floor(yf), jnp.floor(zf)
    tx, ty, tz = xf - x0f, yf - y0f, zf - z0f
    x0, y0, z0 = x0f.astype(jnp.int32), y0f.astype(jnp.int32), z0f.astype(jnp.int32)
    flat_in = inputs.reshape(N, C, T * H * W)
    out = jnp.zeros((N, C, H, W), jnp.float32)
    for dz in (0, 1):
        zc = z0 + dz
        wz = tz if dz else 1.0 - tz
        for dy in (0, 1):
            yc = y0 + dy
            wy = ty if dy else 1.0 - ty
            for dx in (0, 1):
                xc = x0 + dx
                wx = tx if dx else 1.0 - tx
                inb = ((zc >= 0) & (zc < T) & (yc >= 0) & (yc < H)
                       & (xc >= 0) & (xc < W))
                flat = (jnp.clip(zc, 0, T - 1) * H * W
                        + jnp.clip(yc, 0, H - 1) * W
                        + jnp.clip(xc, 0, W - 1))
                idx = jnp.broadcast_to(flat.reshape(N, 1, H * W), (N, C, H * W))
                vals = jnp.take_along_axis(flat_in, idx, axis=2).reshape(N, C, H, W)
                wgt = (wz * wy * wx * inb.astype(jnp.float32))[:, None, :, :]
                out = out + vals * wgt
    return out.reshape(N, C, 1, H, W)


if __name__ == "__main__":
    key = jax.random.PRNGKey(0)
    k1, k2, k3, k4 = jax.random.split(key, 4)
    N, C, T, H, W = 2, 4, 8, 16, 16
    inputs = jax.random.normal(k1, (N, C, T, H, W), dtype=jnp.float32)
    d = jax.random.normal(k2, (N, H, W), dtype=jnp.float32) * 2.0
    u = jax.random.normal(k3, (N, H, W), dtype=jnp.float32) * 2.0
    v = jax.random.normal(k4, (N, H, W), dtype=jnp.float32) * 2.0

    ref = sttn_reference(inputs, d, u, v)

    # Default (auto) tiling.
    out = jax.block_until_ready(sttn_forward(inputs, d, u, v))
    assert out.shape == (N, C, 1, H, W), out.shape
    assert jnp.allclose(out, ref, atol=1e-4, rtol=1e-4), float(jnp.max(jnp.abs(out - ref)))

    # Small tiles: exercises multiple pixel tiles, the multi-chunk K accumulation and the
    # band-limited (scalar-prefetched) chunk windows.
    out2 = jax.block_until_ready(sttn_forward(inputs, d, u, v, tile=128, tk=128))
    assert jnp.allclose(out2, ref, atol=1e-4, rtol=1e-4), float(jnp.max(jnp.abs(out2 - ref)))

    print("KERNEL_OK")
</pallas_src>

<mosaic_0001>
module attributes {stable_mosaic.version = 11 : i64} {
  func.func @_sttn_kernel(%arg0: i32, %arg1: i32, %arg2: i32, %arg3: memref<2x1xi32, #tpu.memory_space<smem>>, %arg4: memref<1x3x256xf32, #tpu.memory_space<vmem>>, %arg5: memref<1x32x256xf32, #tpu.memory_space<vmem>>, %arg6: memref<1x4x256xf32, #tpu.memory_space<vmem>>, %arg7: memref<32x256xf32, #tpu.memory_space<vmem>>) attributes {dimension_semantics = [#tpu.dimension_semantics<parallel>, #tpu.dimension_semantics<parallel>, #tpu.dimension_semantics<arbitrary>], iteration_bounds = array<i64: 2, 1, 1>, scalar_prefetch = 1 : i64, scratch_operands = 1 : i64, tpu.core_type = #tpu.core_type<tc>, window_params = [{transform_indices = @transform_0, window_bounds = array<i64: 1, 3, 256>}, {transform_indices = @transform_1, window_bounds = array<i64: 1, 32, 256>}, {transform_indices = @transform_2, window_bounds = array<i64: 1, 4, 256>}]} {
    %c0_i32 = arith.constant 0 : i32
    %0 = arith.cmpi eq, %arg2, %c0_i32 : i32
    %1 = arith.extui %0 : i1 to i32
    %c0_i32_0 = arith.constant 0 : i32
    %2 = arith.cmpi ne, %1, %c0_i32_0 : i32
    scf.if %2 {
      %cst_43 = arith.constant 0.000000e+00 : f32
      %133 = vector.broadcast %cst_43 : f32 to vector<32x256xf32>
      %c0_44 = arith.constant 0 : index
      %c0_45 = arith.constant 0 : index
      %134 = vector.load %arg7[%c0_44, %c0_45] : memref<32x256xf32, #tpu.memory_space<vmem>>, vector<32x256xf32>
      tpu.vector_store %arg7[%c0_44, %c0_45], %133 {strides = array<i32>} : memref<32x256xf32, #tpu.memory_space<vmem>>, vector<32x256xf32>,
    } else {
    }
    %c0 = arith.constant 0 : index
    %c0_1 = arith.constant 0 : index
    %c0_2 = arith.constant 0 : index
    %3 = vector.load %arg4[%c0, %c0_1, %c0_2] : memref<1x3x256xf32, #tpu.memory_space<vmem>>, vector<1x3x256xf32>
    %4 = vector.shape_cast %3 : vector<1x3x256xf32> to vector<3x256xf32>
    %5 = vector.extract_strided_slice %4 {offsets = [0, 0], sizes = [1, 256], strides = [1, 1]} : vector<3x256xf32> to vector<1x256xf32>
    %6 = vector.extract_strided_slice %4 {offsets = [1, 0], sizes = [1, 256], strides = [1, 1]} : vector<3x256xf32> to vector<1x256xf32>
    %7 = math.floor %5 : vector<1x256xf32>
    %8 = math.floor %6 : vector<1x256xf32>
    %9 = arith.subf %5, %7 : vector<1x256xf32>
    %10 = arith.subf %6, %8 : vector<1x256xf32>
    %11 = arith.fptosi %7 : vector<1x256xf32> to vector<1x256xi32>
    %12 = arith.fptosi %8 : vector<1x256xf32> to vector<1x256xi32>
    %13 = arith.index_cast %arg0 : i32 to index
    %14 = arith.index_cast %arg1 : i32 to index
    %15 = memref.load %arg3[%13, %14] : memref<2x1xi32, #tpu.memory_space<smem>>
    %16 = arith.addi %15, %arg2 : i32
    %c256_i32 = arith.constant 256 : i32
    %17 = arith.muli %16, %c256_i32 : i32
    %18 = tpu.iota {dimensions = array<i32: 0>} : vector<256x256xi32>
    %19 = vector.broadcast %17 : i32 to vector<256x256xi32>
    %20 = arith.addi %19, %18 : vector<256x256xi32>
    %cst = arith.constant 1.000000e+00 : f32
    %21 = vector.broadcast %cst : f32 to vector<1x256xf32>
    %22 = arith.subf %21, %10 : vector<1x256xf32>
    %c0_i32_3 = arith.constant 0 : i32
    %23 = vector.broadcast %c0_i32_3 : i32 to vector<1x256xi32>
    %24 = arith.addi %12, %23 : vector<1x256xi32>
    %c0_i32_4 = arith.constant 0 : i32
    %25 = vector.broadcast %c0_i32_4 : i32 to vector<1x256xi32>
    %26 = arith.cmpi sge, %24, %25 : vector<1x256xi32>
    %c16_i32 = arith.constant 16 : i32
    %27 = vector.broadcast %c16_i32 : i32 to vector<1x256xi32>
    %28 = arith.cmpi slt, %24, %27 : vector<1x256xi32>
    %29 = arith.andi %26, %28 : vector<1x256xi1>
    %cst_5 = arith.constant 1.000000e+00 : f32
    %30 = vector.broadcast %cst_5 : f32 to vector<1x256xf32>
    %31 = arith.subf %30, %9 : vector<1x256xf32>
    %c0_i32_6 = arith.constant 0 : i32
    %32 = vector.broadcast %c0_i32_6 : i32 to vector<1x256xi32>
    %33 = arith.addi %11, %32 : vector<1x256xi32>
    %c0_i32_7 = arith.constant 0 : i32
    %34 = vector.broadcast %c0_i32_7 : i32 to vector<1x256xi32>
    %35 = arith.cmpi sge, %33, %34 : vector<1x256xi32>
    %36 = arith.andi %29, %35 : vector<1x256xi1>
    %c16_i32_8 = arith.constant 16 : i32
    %37 = vector.broadcast %c16_i32_8 : i32 to vector<1x256xi32>
    %38 = arith.cmpi slt, %33, %37 : vector<1x256xi32>
    %39 = arith.andi %36, %38 : vector<1x256xi1>
    %40 = arith.mulf %22, %31 : vector<1x256xf32>
    %cst_9 = arith.constant 0.000000e+00 : f32
    %41 = vector.broadcast %cst_9 : f32 to vector<1x256xf32>
    %42 = arith.select %39, %40, %41 : vector<1x256xi1>, vector<1x256xf32>
    %c16_i32_10 = arith.constant 16 : i32
    %43 = vector.broadcast %c16_i32_10 : i32 to vector<1x256xi32>
    %44 = arith.muli %24, %43 : vector<1x256xi32>
    %45 = arith.addi %44, %33 : vector<1x256xi32>
    %46 = vector.broadcast %45 : vector<1x256xi32> to vector<256x256xi32>
    %47 = arith.cmpi eq, %20, %46 : vector<256x256xi32>
    %cst_11 = arith.constant 0.000000e+00 : f32
    %48 = vector.shape_cast %42 : vector<1x256xf32> to vector<1x256xf32>
    %49 = vector.broadcast %48 : vector<1x256xf32> to vector<256x256xf32>
    %50 = vector.broadcast %cst_11 : f32 to vector<256x256xf32>
    %51 = arith.select %47, %49, %50 : vector<256x256xi1>, vector<256x256xf32>
    %c1_i32 = arith.constant 1 : i32
    %52 = vector.broadcast %c1_i32 : i32 to vector<1x256xi32>
    %53 = arith.addi %11, %52 : vector<1x256xi32>
    %c0_i32_12 = arith.constant 0 : i32
    %54 = vector.broadcast %c0_i32_12 : i32 to vector<1x256xi32>
    %55 = arith.cmpi sge, %53, %54 : vector<1x256xi32>
    %56 = arith.andi %29, %55 : vector<1x256xi1>
    %c16_i32_13 = arith.constant 16 : i32
    %57 = vector.broadcast %c16_i32_13 : i32 to vector<1x256xi32>
    %58 = arith.cmpi slt, %53, %57 : vector<1x256xi32>
    %59 = arith.andi %56, %58 : vector<1x256xi1>
    %60 = arith.mulf %22, %9 : vector<1x256xf32>
    %cst_14 = arith.constant 0.000000e+00 : f32
    %61 = vector.broadcast %cst_14 : f32 to vector<1x256xf32>
    %62 = arith.select %59, %60, %61 : vector<1x256xi1>, vector<1x256xf32>
    %c16_i32_15 = arith.constant 16 : i32
    %63 = vector.broadcast %c16_i32_15 : i32 to vector<1x256xi32>
    %64 = arith.muli %24, %63 : vector<1x256xi32>
    %65 = arith.addi %64, %53 : vector<1x256xi32>
    %66 = vector.broadcast %65 : vector<1x256xi32> to vector<256x256xi32>
    %67 = arith.cmpi eq, %20, %66 : vector<256x256xi32>
    %cst_16 = arith.constant 0.000000e+00 : f32
    %68 = vector.shape_cast %62 : vector<1x256xf32> to vector<1x256xf32>
    %69 = vector.broadcast %68 : vector<1x256xf32> to vector<256x256xf32>
    %70 = vector.broadcast %cst_16 : f32 to vector<256x256xf32>
    %71 = arith.select %67, %69, %70 : vector<256x256xi1>, vector<256x256xf32>
    %72 = arith.addf %51, %71 : vector<256x256xf32>
    %c1_i32_17 = arith.constant 1 : i32
    %73 = vector.broadcast %c1_i32_17 : i32 to vector<1x256xi32>
    %74 = arith.addi %12, %73 : vector<1x256xi32>
    %c0_i32_18 = arith.constant 0 : i32
    %75 = vector.broadcast %c0_i32_18 : i32 to vector<1x256xi32>
    %76 = arith.cmpi sge, %74, %75 : vector<1x256xi32>
    %c16_i32_19 = arith.constant 16 : i32
    %77 = vector.broadcast %c16_i32_19 : i32 to vector<1x256xi32>
    %78 = arith.cmpi slt, %74, %77 : vector<1x256xi32>
    %79 = arith.andi %76, %78 : vector<1x256xi1>
    %cst_20 = arith.constant 1.000000e+00 : f32
    %80 = vector.broadcast %cst_20 : f32 to vector<1x256xf32>
    %81 = arith.subf %80, %9 : vector<1x256xf32>
    %c0_i32_21 = arith.constant 0 : i32
    %82 = vector.broadcast %c0_i32_21 : i32 to vector<1x256xi32>
    %83 = arith.addi %11, %82 : vector<1x256xi32>
    %c0_i32_22 = arith.constant 0 : i32
    %84 = vector.broadcast %c0_i32_22 : i32 to vector<1x256xi32>
    %85 = arith.cmpi sge, %83, %84 : vector<1x256xi32>
    %86 = arith.andi %79, %85 : vector<1x256xi1>
    %c16_i32_23 = arith.constant 16 : i32
    %87 = vector.broadcast %c16_i32_23 : i32 to vector<1x256xi32>
    %88 = arith.cmpi slt, %83, %87 : vector<1x256xi32>
    %89 = arith.andi %86, %88 : vector<1x256xi1>
    %90 = arith.mulf %10, %81 : vector<1x256xf32>
    %cst_24 = arith.constant 0.000000e+00 : f32
    %91 = vector.broadcast %cst_24 : f32 to vector<1x256xf32>
    %92 = arith.select %89, %90, %91 : vector<1x256xi1>, vector<1x256xf32>
    %c16_i32_25 = arith.constant 16 : i32
    %93 = vector.broadcast %c16_i32_25 : i32 to vector<1x256xi32>
    %94 = arith.muli %74, %93 : vector<1x256xi32>
    %95 = arith.addi %94, %83 : vector<1x256xi32>
    %96 = vector.broadcast %95 : vector<1x256xi32> to vector<256x256xi32>
    %97 = arith.cmpi eq, %20, %96 : vector<256x256xi32>
    %cst_26 = arith.constant 0.000000e+00 : f32
    %98 = vector.shape_cast %92 : vector<1x256xf32> to vector<1x256xf32>
    %99 = vector.broadcast %98 : vector<1x256xf32> to vector<256x256xf32>
    %100 = vector.broadcast %cst_26 : f32 to vector<256x256xf32>
    %101 = arith.select %97, %99, %100 : vector<256x256xi1>, vector<256x256xf32>
    %102 = arith.addf %72, %101 : vector<256x256xf32>
    %c1_i32_27 = arith.constant 1 : i32
    %103 = vector.broadcast %c1_i32_27 : i32 to vector<1x256xi32>
    %104 = arith.addi %11, %103 : vector<1x256xi32>
    %c0_i32_28 = arith.constant 0 : i32
    %105 = vector.broadcast %c0_i32_28 : i32 to vector<1x256xi32>
    %106 = arith.cmpi sge, %104, %105 : vector<1x256xi32>
    %107 = arith.andi %79, %106 : vector<1x256xi1>
    %c16_i32_29 = arith.constant 16 : i32
    %108 = vector.broadcast %c16_i32_29 : i32 to vector<1x256xi32>
    %109 = arith.cmpi slt, %104, %108 : vector<1x256xi32>
    %110 = arith.andi %107, %109 : vector<1x256xi1>
    %111 = arith.mulf %10, %9 : vector<1x256xf32>
    %cst_30 = arith.constant 0.000000e+00 : f32
    %112 = vector.broadcast %cst_30 : f32 to vector<1x256xf32>
    %113 = arith.select %110, %111, %112 : vector<1x256xi1>, vector<1x256xf32>
    %c16_i32_31 = arith.constant 16 : i32
    %114 = vector.broadcast %c16_i32_31 : i32 to vector<1x256xi32>
    %115 = arith.muli %74, %114 : vector<1x256xi32>
    %116 = arith.addi %115, %104 : vector<1x256xi32>
    %117 = vector.broadcast %116 : vector<1x256xi32> to vector<256x256xi32>
    %118 = arith.cmpi eq, %20, %117 : vector<256x256xi32>
    %cst_32 = arith.constant 0.000000e+00 : f32
    %119 = vector.shape_cast %113 : vector<1x256xf32> to vector<1x256xf32>
    %120 = vector.broadcast %119 : vector<1x256xf32> to vector<256x256xf32>
    %121 = vector.broadcast %cst_32 : f32 to vector<256x256xf32>
    %122 = arith.select %118, %120, %121 : vector<256x256xi1>, vector<256x256xf32>
    %123 = arith.addf %102, %122 : vector<256x256xf32>
    %c0_33 = arith.constant 0 : index
    %c0_34 = arith.constant 0 : index
    %c0_35 = arith.constant 0 : index
    %124 = vector.load %arg5[%c0_33, %c0_34, %c0_35] : memref<1x32x256xf32, #tpu.memory_space<vmem>>, vector<1x32x256xf32>
    %125 = vector.shape_cast %124 : vector<1x32x256xf32> to vector<32x256xf32>
    %c0_36 = arith.constant 0 : index
    %c0_37 = arith.constant 0 : index
    %126 = vector.load %arg7[%c0_36, %c0_37] : memref<32x256xf32, #tpu.memory_space<vmem>>, vector<32x256xf32>
    %cst_38 = arith.constant dense<0.000000e+00> : vector<32x256xf32>
    %127 = tpu.matmul %125, %123, %cst_38 {dimension_numbers = #tpu.dot_dimension_numbers<[1], [0], [0], [1], [0, 0, 1, 1], [], []>} : vector<32x256xf32>, vector<256x256xf32>, vector<32x256xf32> -> vector<32x256xf32>
    %128 = arith.addf %126, %127 : vector<32x256xf32>
    %c0_39 = arith.constant 0 : index
    %c0_40 = arith.constant 0 : index
    %129 = vector.load %arg7[%c0_39, %c0_40] : memref<32x256xf32, #tpu.memory_space<vmem>>, vector<32x256xf32>
    tpu.vector_store %arg7[%c0_39, %c0_40], %128 {strides = array<i32>} : memref<32x256xf32, #tpu.memory_space<vmem>>, vector<32x256xf32>,
    %c0_i32_41 = arith.constant 0 : i32
    %130 = arith.cmpi eq, %arg2, %c0_i32_41 : i32
    %131 = arith.extui %130 : i1 to i32
    %c0_i32_42 = arith.constant 0 : i32
    %132 = arith.cmpi ne, %131, %c0_i32_42 : i32
    scf.if %132 {
      %133 = vector.extract_strided_slice %4 {offsets = [2, 0], sizes = [1, 256], strides = [1, 1]} : vector<3x256xf32> to vector<1x256xf32>
      %134 = math.floor %133 : vector<1x256xf32>
      %135 = arith.subf %133, %134 : vector<1x256xf32>
      %136 = arith.fptosi %134 : vector<1x256xf32> to vector<1x256xi32>
      %137 = tpu.iota {dimensions = array<i32: 0>} : vector<8x256xi32>
      %138 = vector.broadcast %136 : vector<1x256xi32> to vector<8x256xi32>
      %139 = arith.cmpi eq, %137, %138 : vector<8x256xi32>
      %cst_43 = arith.constant 1.000000e+00 : f32
      %140 = vector.broadcast %cst_43 : f32 to vector<1x256xf32>
      %141 = arith.subf %140, %135 : vector<1x256xf32>
      %cst_44 = arith.constant 0.000000e+00 : f32
      %142 = vector.shape_cast %141 : vector<1x256xf32> to vector<1x256xf32>
      %143 = vector.broadcast %142 : vector<1x256xf32> to vector<8x256xf32>
      %144 = vector.broadcast %cst_44 : f32 to vector<8x256xf32>
      %145 = arith.select %139, %143, %144 : vector<8x256xi1>, vector<8x256xf32>
      %c1_i32_45 = arith.constant 1 : i32
      %146 = vector.broadcast %c1_i32_45 : i32 to vector<1x256xi32>
      %147 = arith.addi %136, %146 : vector<1x256xi32>
      %148 = vector.broadcast %147 : vector<1x256xi32> to vector<8x256xi32>
      %149 = arith.cmpi eq, %137, %148 : vector<8x256xi32>
      %cst_46 = arith.constant 0.000000e+00 : f32
      %150 = vector.shape_cast %135 : vector<1x256xf32> to vector<1x256xf32>
      %151 = vector.broadcast %150 : vector<1x256xf32> to vector<8x256xf32>
      %152 = vector.broadcast %cst_46 : f32 to vector<8x256xf32>
      %153 = arith.select %149, %151, %152 : vector<8x256xi1>, vector<8x256xf32>
      %154 = arith.addf %145, %153 : vector<8x256xf32>
      %c0_47 = arith.constant 0 : index
      %c0_48 = arith.constant 0 : index
      %155 = vector.load %arg7[%c0_47, %c0_48] : memref<32x256xf32, #tpu.memory_space<vmem>>, vector<32x256xf32>
      %156 = tpu.concatenate %154, %154, %154, %154 in 0 : vector<8x256xf32>, vector<8x256xf32>, vector<8x256xf32>, vector<8x256xf32> -> vector<32x256xf32>
      %157 = arith.mulf %155, %156 : vector<32x256xf32>
      %158 = tpu.iota {dimensions = array<i32: 1>} : vector<4x32xi32>
      %159 = tpu.iota {dimensions = array<i32: 0>} : vector<4x32xi32>
      %c8_i32 = arith.constant 8 : i32
      %160 = vector.broadcast %c8_i32 : i32 to vector<4x32xi32>
      %161 = arith.muli %159, %160 : vector<4x32xi32>
      %162 = arith.cmpi sge, %158, %161 : vector<4x32xi32>
      %c1_i32_49 = arith.constant 1 : i32
      %163 = vector.broadcast %c1_i32_49 : i32 to vector<4x32xi32>
      %164 = arith.addi %159, %163 : vector<4x32xi32>
      %c8_i32_50 = arith.constant 8 : i32
      %165 = vector.broadcast %c8_i32_50 : i32 to vector<4x32xi32>
      %166 = arith.muli %164, %165 : vector<4x32xi32>
      %167 = arith.cmpi slt, %158, %166 : vector<4x32xi32>
      %168 = arith.andi %162, %167 : vector<4x32xi1>
      %169 = arith.extui %168 : vector<4x32xi1> to vector<4x32xi32>
      %170 = arith.sitofp %169 : vector<4x32xi32> to vector<4x32xf32>
      %cst_51 = arith.constant dense<0.000000e+00> : vector<4x256xf32>
      %171 = tpu.matmul %170, %157, %cst_51 {dimension_numbers = #tpu.dot_dimension_numbers<[1], [0], [0], [1], [0, 0, 1, 1], [], []>} : vector<4x32xf32>, vector<32x256xf32>, vector<4x256xf32> -> vector<4x256xf32>
      %c0_52 = arith.constant 0 : index
      %c0_53 = arith.constant 0 : index
      %c0_54 = arith.constant 0 : index
      %172 = vector.load %arg6[%c0_52, %c0_53, %c0_54] : memref<1x4x256xf32, #tpu.memory_space<vmem>>, vector<1x4x256xf32>
      %173 = vector.shape_cast %172 : vector<1x4x256xf32> to vector<4x256xf32>
      %174 = vector.shape_cast %171 : vector<4x256xf32> to vector<1x4x256xf32>
      tpu.vector_store %arg6[%c0_52, %c0_53, %c0_54], %174 {strides = array<i32>} : memref<1x4x256xf32, #tpu.memory_space<vmem>>, vector<1x4x256xf32>,
    } else {
    }
    return
  }
  func.func @transform_0(%arg0: i32, %arg1: i32, %arg2: i32, %arg3: memref<2x1xi32, #tpu.memory_space<smem>>) -> (i32, i32, i32) {
    %c0_i32 = arith.constant 0 : i32
    %c0_i32_0 = arith.constant 0 : i32
    return %arg0, %c0_i32, %arg1 : i32, i32, i32
  }
  func.func @transform_1(%arg0: i32, %arg1: i32, %arg2: i32, %arg3: memref<2x1xi32, #tpu.memory_space<smem>>) -> (i32, i32, i32) {
    %0 = arith.index_cast %arg0 : i32 to index
    %1 = arith.index_cast %arg1 : i32 to index
    %2 = memref.load %arg3[%0, %1] : memref<2x1xi32, #tpu.memory_space<smem>>
    %3 = arith.addi %2, %arg2 : i32
    %c0_i32 = arith.constant 0 : i32
    %c0_i32_0 = arith.constant 0 : i32
    return %arg0, %c0_i32, %3 : i32, i32, i32
  }
  func.func @transform_2(%arg0: i32, %arg1: i32, %arg2: i32, %arg3: memref<2x1xi32, #tpu.memory_space<smem>>) -> (i32, i32, i32) {
    %c0_i32 = arith.constant 0 : i32
    %c0_i32_0 = arith.constant 0 : i32
    return %arg0, %c0_i32, %arg1 : i32, i32, i32
  }
}

</mosaic_0001>

<llo_original>
// kernel: tpu_custom_call.1
$region0: #{tpu_custom_call.1}
  #allocation0 [shape = 'u32[]', space=smem, size = 0x4, offset = 0x4, fixed_abs, tag = 'smem constant byte address 0x4 - core index']
  #allocation1 [shape = 'u32[144,128]{1,0:T(1,128)}', space=vmem, size = 0x12000, scoped, tag = 'internal scratch']
  #allocation2 [shape = 'f32[32,256]{1,0:T(8,128)}', space=vmem, size = 0x8000, scoped, tag = 'scratch operand']
  #allocation3 [shape = 's32[1]{0}', space=sflag, size = 0x4, scoped, tag = 'scoped memory for tpu_custom_call.1']
  #allocation4 [shape = 'u8[1024]{0}', space=smem, size = 0x400, scoped, tag = 'prefetched SMEM operand 0']
  %s0 = inlined_call_operand.vmem [shape: s32[2,1], index: 0, kind: input, shape index: {}]
  %s1 = inlined_call_operand.vmem [shape: f32[2,3,256], index: 1, kind: input, shape index: {}]
  %s2 = inlined_call_operand.hbm [shape: f32[2,32,256], index: 2, kind: input, shape index: {}]
  %s3 = inlined_call_operand.hbm [shape: f32[2,4,256], index: 3, kind: output, shape index: {}]
  %s4 = sld [smem:[#allocation0]]
  $region53: #{tpu_custom_call.1} parent=0
    _
  %s6 = ssub.s32 1, %s4
  %s7 = scalar_select 0, %s6, %s4
  %s8 = sshll.u32 %s0, 4
  %s9 = int_to_ptr.vmem [resolvable:$true] %s8
  %11 = dma.vmem_to_smem %s9, 32, [#allocation4], [#allocation3]
  %12 = dma.done [#allocation3], 32
  %13 = sfence
  $region1: #{tpu_custom_call.1} parent=0
    #allocation5 [shape = 'u8[65536]{0}', space=vmem, size = 0x10000, scoped, tag = 'input window, operand 2']
    #allocation6 [shape = 's32[2]{0}', space=sflag, size = 0x8, scoped, tag = 'scoped memory for tpu_custom_call.1']
    #allocation7 [shape = 's32[2]{0}', space=sflag, size = 0x8, scoped, tag = 'scoped memory for tpu_custom_call.1']
    #allocation8 [shape = 'u8[8192]{0}', space=vmem, size = 0x2000, scoped, tag = 'output window, operand 0']
    %14 = vsyncpa [#allocation6], 0
    %s15 = scalar_lea.sflag [#allocation6], 1
    %16 = vsyncpa %s15, 0
    %17 = vsyncpa [#allocation7], 0
    %s18 = scalar_lea.sflag [#allocation7], 1
    %19 = vsyncpa %s18, 0
    loop: start=0, step=1, limit=4
    $region2: #{tpu_custom_call.1} parent=1 // loop_pre_header
      _
    $region3: #{tpu_custom_call.1} parent=1 // loop_header
      %s21 = sphi 0, %s25
      %p22 = scmp.ge.s32.totalorder %s21, 4
      %s28 = sphi 0, %s47
      %s29 = sphi 0, %s43
      %s30 = sphi 0, %s39
      %s31 = sphi 0, %s28
      %s32 = sphi 0, %s29
      %s33 = sphi 0, %s30
      %s34 = sphi 0, %s31
      %s35 = sphi 0, %s32
      %s36 = sphi 0, %s33
      %s52 = sphi 0, %s54
      %s55 = sphi 0, %s52
      %s56 = sphi 0, %s55
      %s72 = sphi 0, %s56
      %s98 = sphi 0, %s100
      %s101 = sphi 0, %s98
      %s102 = sphi 0, %s101
      %s118 = sphi 0, %s102
      %s126 = sphi 0, %s128
      %s129 = sphi 0, %s126
      %s130 = sphi 0, %s129
      %s146 = sphi 0, %s130
    $region4: #{tpu_custom_call.1} parent=1 // loop_header_branch
      %24 = sbr.rel (%p22) target = $region8
    $region5: #{tpu_custom_call.1} parent=1 // loop_body
      %s26 = ssub.s32 %s21, 1
      %s27 = ssub.s32 %s21, 2
      %s37 = sadd.s32 1, %s30
      %p38 = scmp.ge.s32.totalorder %s37, 1
      %s39 = scalar_select %p38, 0, %s37
      %s40 = sadd.s32 1, %s29
      %s41 = scalar_select %p38, %s40, %s29
      %p42 = scmp.ge.s32.totalorder %s41, 1
      %s43 = scalar_select %p42, 0, %s41
      %s44 = sadd.s32 1, %s28
      %s45 = scalar_select %p42, %s44, %s28
      %p46 = scmp.ge.s32.totalorder %s45, 2
      %s47 = scalar_select %p46, 0, %s45
      %s48 = ssub.s32 %s28, %s47
      %s49 = ssub.s32 %s29, %s43
      %s50 = sor.u32 %s48, %s49
      %p51 = scmp.eq.s32.totalorder %s50, 0
      %s53 = sadd.s32 %s52, 1
      %s54 = scalar_select %p51, %s52, %s53
      %p57 = pneg %p51
      %p58 = scmp.eq.s32.totalorder %s21, 1
      %p59 = por %p57, %p58
      %p60 = scmp.ne.s32.totalorder %s52, %s55
      %p61 = scmp.eq.s32.totalorder %s21, 0
      %p62 = por %p60, %p61
      %p63 = scmp.ne.s32.totalorder %s52, %s55
      %p64 = scmp.eq.s32.totalorder %s26, 1
      %p65 = por %p63, %p64
      %p66 = scmp.ne.s32.totalorder %s55, %s56
      %p67 = scmp.eq.s32.totalorder %s26, 0
      %p68 = por %p66, %p67
      %p69 = scmp.ne.s32.totalorder %s55, %s56
      %p70 = scmp.eq.s32.totalorder %s27, 1
      %p71 = por %p69, %p70
      %p73 = scmp.ne.s32.totalorder %s56, %s72
      %p74 = scmp.eq.s32.totalorder %s27, 0
      %p75 = por %p73, %p74
      %s76 = sshra.s32 %s29, 7
      %s77 = sand.u32 %s29, 127
      %s78 = sadd.s32 %s76, %s28
      %s79 = smul.u32 %s78, 128
      %s80 = sshra.s32 %s29, 7
      %s81 = sand.u32 %s29, 127
      %s82 = sadd.s32 %s79, %s81
      %s83 = sld [smem:[#allocation4 + %s82]]
      %s84 = sadd.s32 %s83, %s30
      %s85 = sshra.s32 %s43, 7
      %s86 = sand.u32 %s43, 127
      %s87 = sadd.s32 %s85, %s47
      %s88 = smul.u32 %s87, 128
      %s89 = sshra.s32 %s43, 7
      %s90 = sand.u32 %s43, 127
      %s91 = sadd.s32 %s88, %s90
      %s92 = sld [smem:[#allocation4 + %s91]]
      %s93 = sadd.s32 %s92, %s39
      %s94 = ssub.s32 %s28, %s47
      %s95 = ssub.s32 %s84, %s93
      %s96 = sor.u32 %s94, %s95
      %p97 = scmp.eq.s32.totalorder %s96, 0
      %s99 = sadd.s32 %s98, 1
      %s100 = scalar_select %p97, %s98, %s99
      %p103 = pneg %p97
      %p104 = scmp.eq.s32.totalorder %s21, 1
      %p105 = por %p103, %p104
      %p106 = scmp.ne.s32.totalorder %s98, %s101
      %p107 = scmp.eq.s32.totalorder %s21, 0
      %p108 = por %p106, %p107
      %p109 = scmp.ne.s32.totalorder %s98, %s101
      %p110 = scmp.eq.s32.totalorder %s26, 1
      %p111 = por %p109, %p110
      %p112 = scmp.ne.s32.totalorder %s101, %s102
      %p113 = scmp.eq.s32.totalorder %s26, 0
      %p114 = por %p112, %p113
      %p115 = scmp.ne.s32.totalorder %s101, %s102
      %p116 = scmp.eq.s32.totalorder %s27, 1
      %p117 = por %p115, %p116
      %p119 = scmp.ne.s32.totalorder %s102, %s118
      %p120 = scmp.eq.s32.totalorder %s27, 0
      %p121 = por %p119, %p120
      %s122 = ssub.s32 %s28, %s47
      %s123 = ssub.s32 %s29, %s43
      %s124 = sor.u32 %s122, %s123
      %p125 = scmp.eq.s32.totalorder %s124, 0
      %s127 = sadd.s32 %s126, 1
      %s128 = scalar_select %p125, %s126, %s127
      %p131 = pneg %p125
      %p132 = scmp.eq.s32.totalorder %s21, 1
      %p133 = por %p131, %p132
      %p134 = scmp.ne.s32.totalorder %s126, %s129
      %p135 = scmp.eq.s32.totalorder %s21, 0
      %p136 = por %p134, %p135
      %p137 = scmp.ne.s32.totalorder %s126, %s129
      %p138 = scmp.eq.s32.totalorder %s26, 1
      %p139 = por %p137, %p138
      %p140 = scmp.ne.s32.totalorder %s129, %s130
      %p141 = scmp.eq.s32.totalorder %s26, 0
      %p142 = por %p140, %p141
      %p143 = scmp.ne.s32.totalorder %s129, %s130
      %p144 = scmp.eq.s32.totalorder %s27, 1
      %p145 = por %p143, %p144
      %p147 = scmp.ne.s32.totalorder %s130, %s146
      %p148 = scmp.eq.s32.totalorder %s27, 0
      %p149 = por %p147, %p148
      %p150 = scmp.le.s32.totalorder 1, %s21
      %p151 = scmp.lt.s32.totalorder %s21, 3
      %p152 = pnand %p150, %p151
      %p153 = pneg %p152
      // Predicated region
      $region9: #{tpu_custom_call.1} parent=5 // pred_check
        _
      $region10: #{tpu_custom_call.1} parent=5 // pred_check_branch
        %155 = sbr.rel (%p152) target = $region12
      $region11: #{tpu_custom_call.1} parent=5 // pred_region
        %s156 = ssub.s32 %s21, 1
      $region12: #{tpu_custom_call.1} parent=5 // pred_fallthru
        _
      %p157 = scmp.lt.s32.totalorder %s21, 2
      // Predicated region
      $region13: #{tpu_custom_call.1} parent=5 // pred_check
        %p158 = pneg %p157
      $region14: #{tpu_custom_call.1} parent=5 // pred_check_branch
        %160 = sbr.rel (%p158) target = $region16
      $region15: #{tpu_custom_call.1} parent=5 // pred_region
        // Predicated region
        $region17: #{tpu_custom_call.1} parent=15 // pred_check
          %p161 = pneg %p62
        $region18: #{tpu_custom_call.1} parent=15 // pred_check_branch
          %163 = sbr.rel (%p161) target = $region20
        $region19: #{tpu_custom_call.1} parent=15 // pred_region
          %s164 = smul.u32 2, %s29
          %p165 = scmp.lt.s32.totalorder %s28, 1
          %s166 = scalar_select %p165, %s28, 1
          %p167 = scmp.lt.s32.totalorder %s164, 1
          %s168 = scalar_select %p167, %s164, 1
          %s169 = smul.addr %s166, 2
          %s170 = sadd.s32 %s168, %s169
          %s171 = smul.addr %s170, 4
          %s172 = scalar_lea.vmem %s1, %s171
          %s173 = smul.u32 2, %s29
        $region20: #{tpu_custom_call.1} parent=15 // pred_fallthru
          _
        // Predicated region
        $region21: #{tpu_custom_call.1} parent=15 // pred_check
          %p174 = pneg %p108
        $region22: #{tpu_custom_call.1} parent=15 // pred_check_branch
          %176 = sbr.rel (%p174) target = $region24
        $region23: #{tpu_custom_call.1} parent=15 // pred_region
          %s177 = sand.u32 %s98, 1
          %s178 = scalar_lea.sflag [#allocation6], %s177
          %s179 = sand.u32 %s98, 1
          %s180 = smul.addr %s179, 64
          %s181 = scalar_lea.vmem [#allocation5], %s180
          %s182 = sshra.s32 %s29, 7
          %s183 = sand.u32 %s29, 127
          %s184 = sadd.s32 %s182, %s28
          %s185 = smul.u32 %s184, 128
          %s186 = sshra.s32 %s29, 7
          %s187 = sand.u32 %s29, 127
          %s188 = sadd.s32 %s185, %s187
          %s189 = sld [smem:[#allocation4 + %s188]]
          %s190 = sadd.s32 %s189, %s30
          %s191 = smul.u32 2, %s190
          %s193 = ssub.s32 1024, 1024
          %194 = vsyncadd %s178, %s193
          %s195 = smul.addr %s28, 8
          %s196 = sadd.s32 %s191, %s195
          %s197 = smul.addr %s196, 128
          %s198 = scalar_lea.hbm %s2, %s197
          %s199 = sshll.u32 %s181, 4
          %s200 = int_to_ptr.vmem [resolvable:$true] %s199
          %205 = dma.hbm_to_vmem [thread:$0]  %s198, 1024, %s200, %s178, 256, 256, 16
        $region24: #{tpu_custom_call.1} parent=15 // pred_fallthru
          _
      $region16: #{tpu_custom_call.1} parent=5 // pred_fallthru
        _
      %p206 = scmp.le.s32.totalorder 1, %s21
      %p207 = scmp.lt.s32.totalorder %s21, 3
      %p208 = pnand %p206, %p207
      %p209 = pneg %p208
      // Predicated region
      $region25: #{tpu_custom_call.1} parent=5 // pred_check
        _
      $region26: #{tpu_custom_call.1} parent=5 // pred_check_branch
        %211 = sbr.rel (%p208) target = $region28
      $region27: #{tpu_custom_call.1} parent=5 // pred_region
        %s212 = ssub.s32 %s21, 1
        %s213 = sand.u32 %s101, 1
        %s214 = scalar_lea.sflag [#allocation6], %s213
        %s215 = sand.u32 %s101, 1
        %s216 = smul.addr %s215, 64
        %s217 = scalar_lea.vmem [#allocation5], %s216
        // Predicated region
        $region29: #{tpu_custom_call.1} parent=27 // pred_check
          %p218 = pneg %p114
        $region30: #{tpu_custom_call.1} parent=27 // pred_check_branch
          %220 = sbr.rel (%p218) target = $region32
        $region31: #{tpu_custom_call.1} parent=27 // pred_region
          %221 = dma.done %s214, 1024
        $region32: #{tpu_custom_call.1} parent=27 // pred_fallthru
          _
        %s222 = smul.u32 2, %s32
        %p223 = scmp.lt.s32.totalorder %s31, 1
        %s224 = scalar_select %p223, %s31, 1
        %p225 = scmp.lt.s32.totalorder %s222, 1
        %s226 = scalar_select %p225, %s222, 1
        %s227 = smul.addr %s224, 2
        %s228 = sadd.s32 %s226, %s227
        %s229 = smul.addr %s228, 4
        %s230 = scalar_lea.vmem %s1, %s229
        %p231 = pneg %p68
        %p232 = pneg %p65
        %s233 = sand.u32 %s101, 1
        %s234 = scalar_lea.sflag [#allocation6], %s233
        %s235 = sand.u32 %s101, 1
        %s236 = smul.addr %s235, 64
        %s237 = scalar_lea.vmem [#allocation5], %s236
        %p238 = pneg %p114
        %p239 = pneg %p111
        %p240 = pneg %p142
        %p241 = pneg %p139
        %s242 = sand.u32 %s129, 1
        %s243 = scalar_lea.sflag [#allocation7], %s242
        %s244 = sand.u32 %s129, 1
        %s245 = smul.addr %s244, 8
        %s246 = scalar_lea.vmem [#allocation8], %s245
        %s247 = smul.u32 2, %s32
        %p248 = scmp.lt.s32.totalorder %s31, 1
        %s249 = scalar_select %p248, %s31, 1
        %p250 = scmp.lt.s32.totalorder %s247, 1
        %s251 = scalar_select %p250, %s247, 1
        %s252 = smul.addr %s249, 2
        %s253 = sadd.s32 %s251, %s252
        %s254 = smul.addr %s253, 4
        %s255 = scalar_lea.vmem %s1, %s254
        %s256 = smul.u32 2, %s32
        %s257 = sshra.s32 %s32, 7
        %s258 = sand.u32 %s32, 127
        %s259 = sadd.s32 %s257, %s31
        %s260 = smul.u32 %s259, 128
        %s261 = sshra.s32 %s32, 7
        %s262 = sand.u32 %s32, 127
        %s263 = sadd.s32 %s260, %s262
        %s264 = sld [smem:[#allocation4 + %s263]]
        %s265 = sadd.s32 %s264, %s33
        %s266 = smul.u32 2, %s265
        %s267 = smul.u32 2, %s32
        %p268 = scmp.eq.s32.totalorder %s33, 0
        // Predicated region
        $region33: #{tpu_custom_call.1} parent=27 // pred_check
          %p269 = pneg %p268
        $region34: #{tpu_custom_call.1} parent=27 // pred_check_branch
          %271 = sbr.rel (%p269) target = $region36
        $region35: #{tpu_custom_call.1} parent=27 // pred_region
          %272 = vst [vmem:[#allocation2] sm:$0xff] 0.0
          %273 = vst [vmem:[#allocation2 + $0x8] sm:$0xff] 0.0
          %274 = vst [vmem:[#allocation2 + $0x10] sm:$0xff] 0.0
          %275 = vst [vmem:[#allocation2 + $0x18] sm:$0xff] 0.0
          %276 = vst [vmem:[#allocation2 + $0x20] sm:$0xff] 0.0
          %277 = vst [vmem:[#allocation2 + $0x28] sm:$0xff] 0.0
          %278 = vst [vmem:[#allocation2 + $0x30] sm:$0xff] 0.0
          %279 = vst [vmem:[#allocation2 + $0x38] sm:$0xff] 0.0
        $region36: #{tpu_custom_call.1} parent=27 // pred_fallthru
          _
        %v280 = vld [vmem:[%s255] sm:$0x77]
        %v281 = vfloor.f32 %v280
        %v282 = vsub.f32 %v280, %v281
        %v283 = vcvt.f32.s32.to.zero.pseudo %v281
        %s284 = sshra.s32 %s32, 7
        %s285 = sand.u32 %s32, 127
        %s286 = sadd.s32 %s284, %s31
        %s287 = smul.u32 %s286, 128
        %s288 = sshra.s32 %s32, 7
        %s289 = sand.u32 %s32, 127
        %s290 = sadd.s32 %s287, %s289
        %s291 = sld [smem:[#allocation4 + %s290]]
        %s292 = sadd.s32 %s291, %s33
        %s293 = smul.u32 %s292, 256
        %v294 = vlaneseq
        %v295 = vshrl.u32 %v294, 7
        %v296 = vadd.s32 %v295, 8
        %v297 = vadd.s32 %v295, 16
        %v298 = vadd.s32 %v295, 24
        %v299 = vadd.s32 %v295, 32
        %v300 = vadd.s32 %v295, 40
        %v301 = vadd.s32 %v295, 48
        %v302 = vadd.s32 %v295, 56
        %v303 = vadd.s32 %v295, 64
        %v304 = vadd.s32 %v295, 72
        %v305 = vadd.s32 %v295, 80
        %v306 = vadd.s32 %v295, 88
        %v307 = vadd.s32 %v295, 96
        %v308 = vadd.s32 %v295, 104
        %v309 = vadd.s32 %v295, 112
        %v310 = vadd.s32 %v295, 120
        %v311 = vadd.s32 %v295, 128
        %v312 = vadd.s32 %v295, 136
        %v313 = vadd.s32 %v295, 144
        %v314 = vadd.s32 %v295, 152
        %v315 = vadd.s32 %v295, 160
        %v316 = vadd.s32 %v295, 168
        %v317 = vadd.s32 %v295, 176
        %v318 = vadd.s32 %v295, 184
        %v319 = vadd.s32 %v295, 192
        %v320 = vadd.s32 %v295, 200
        %v321 = vadd.s32 %v295, 208
        %v322 = vadd.s32 %v295, 216
        %v323 = vadd.s32 %v295, 224
        %v324 = vadd.s32 %v295, 232
        %v325 = vadd.s32 %v295, 240
        %v326 = vadd.s32 %v295, 248
        %v327 = vstv %s293
        %v328 = vadd.s32 %v327, %v295
        %v329 = vadd.s32 %v327, %v296
        %v330 = vadd.s32 %v327, %v297
        %v331 = vadd.s32 %v327, %v298
        %v332 = vadd.s32 %v327, %v299
        %v333 = vadd.s32 %v327, %v300
        %v334 = vadd.s32 %v327, %v301
        %v335 = vadd.s32 %v327, %v302
        %v336 = vadd.s32 %v327, %v303
        %v337 = vadd.s32 %v327, %v304
        %v338 = vadd.s32 %v327, %v305
        %v339 = vadd.s32 %v327, %v306
        %v340 = vadd.s32 %v327, %v307
        %v341 = vadd.s32 %v327, %v308
        %v342 = vadd.s32 %v327, %v309
        %v343 = vadd.s32 %v327, %v310
        %v344 = vadd.s32 %v327, %v311
        %v345 = vadd.s32 %v327, %v312
        %v346 = vadd.s32 %v327, %v313
        %v347 = vadd.s32 %v327, %v314
        %v348 = vadd.s32 %v327, %v315
        %v349 = vadd.s32 %v327, %v316
        %v350 = vadd.s32 %v327, %v317
        %v351 = vadd.s32 %v327, %v318
        %v352 = vadd.s32 %v327, %v319
        %v353 = vadd.s32 %v327, %v320
        %v354 = vadd.s32 %v327, %v321
        %v355 = vadd.s32 %v327, %v322
        %v356 = vadd.s32 %v327, %v323
        %v357 = vadd.s32 %v327, %v324
        %v358 = vadd.s32 %v327, %v325
        %v359 = vadd.s32 %v327, %v326
        %v360 = vsub.f32 1.0, %v282
        %vm361 = vcmp.ge.s32.totalorder %v283, 0
        %vm362 = vcmp.lt.s32.totalorder %v283, 16
        %vm363 = vmand %vm361, %vm362
        %v364 = vsel %vm361, 1, 0
        %v365 = vrot.slane %v364, 7
        %vm366 = vcmp.ne.s32.totalorder %v365, 0
        %vm367 = vmand %vm363, %vm366
        %v368 = vsel %vm362, 1, 0
        %v369 = vrot.slane %v368, 7
        %vm370 = vcmp.ne.s32.totalorder %v369, 0
        %vm371 = vmand %vm367, %vm370
        %v373 = vrot.slane %v360, 7
        %v375 = vmul.f32 %v360, %v373
        %v376 = vsel %vm371, %v375, 0.0
        %v377 = vmul.u32 %v283, 16
        %v378 = vrot.slane %v283, 7
        %v379 = vadd.s32 %v377, %v378
        %v380 = vlaneseq
        %v381 = vshrl.u32 %v380, 7
        %v382 = vsub.s32 1, %v381
        %v383 = vrot.slane %v379, %v382
        %v384 = vlaneseq
        %v385 = vshrl.u32 %v384, 7
        %v386 = vsub.s32 5, %v385
        %v387 = vrot.slane %v379, %v386
        %v388 = vlaneseq
        %v389 = vshrl.u32 %v388, 7
        %v390 = vsub.s32 1, %v389
        %v391 = vrot.slane %v383, %v390
        %v392 = vlaneseq
        %v393 = vshrl.u32 %v392, 7
        %v394 = vsub.s32 1, %v393
        %v395 = vrot.slane %v387, %v394
        %vm396 = vcmp.eq.s32.totalorder %v328, %v391
        %vm397 = vcmp.eq.s32.totalorder %v328, %v395
        %vm398 = vcmp.eq.s32.totalorder %v329, %v391
        %vm399 = vcmp.eq.s32.totalorder %v329, %v395
        %vm400 = vcmp.eq.s32.totalorder %v330, %v391
        %vm401 = vcmp.eq.s32.totalorder %v330, %v395
        %vm402 = vcmp.eq.s32.totalorder %v331, %v391
        %vm403 = vcmp.eq.s32.totalorder %v331, %v395
        %vm404 = vcmp.eq.s32.totalorder %v332, %v391
        %vm405 = vcmp.eq.s32.totalorder %v332, %v395
        %vm406 = vcmp.eq.s32.totalorder %v333, %v391
        %vm407 = vcmp.eq.s32.totalorder %v333, %v395
        %vm408 = vcmp.eq.s32.totalorder %v334, %v391
        %vm409 = vcmp.eq.s32.totalorder %v334, %v395
        %vm410 = vcmp.eq.s32.totalorder %v335, %v391
        %vm411 = vcmp.eq.s32.totalorder %v335, %v395
        %vm412 = vcmp.eq.s32.totalorder %v336, %v391
        %vm413 = vcmp.eq.s32.totalorder %v336, %v395
        %vm414 = vcmp.eq.s32.totalorder %v337, %v391
        %vm415 = vcmp.eq.s32.totalorder %v337, %v395
        %vm416 = vcmp.eq.s32.totalorder %v338, %v391
        %vm417 = vcmp.eq.s32.totalorder %v338, %v395
        %vm418 = vcmp.eq.s32.totalorder %v339, %v391
        %vm419 = vcmp.eq.s32.totalorder %v339, %v395
        %vm420 = vcmp.eq.s32.totalorder %v340, %v391
        %vm421 = vcmp.eq.s32.totalorder %v340, %v395
        %vm422 = vcmp.eq.s32.totalorder %v341, %v391
        %vm423 = vcmp.eq.s32.totalorder %v341, %v395
        %vm424 = vcmp.eq.s32.totalorder %v342, %v391
        %vm425 = vcmp.eq.s32.totalorder %v342, %v395
        %vm426 = vcmp.eq.s32.totalorder %v343, %v391
        %vm427 = vcmp.eq.s32.totalorder %v343, %v395
        %vm428 = vcmp.eq.s32.totalorder %v344, %v391
        %vm429 = vcmp.eq.s32.totalorder %v344, %v395
        %vm430 = vcmp.eq.s32.totalorder %v345, %v391
        %vm431 = vcmp.eq.s32.totalorder %v345, %v395
        %vm432 = vcmp.eq.s32.totalorder %v346, %v391
        %vm433 = vcmp.eq.s32.totalorder %v346, %v395
        %vm434 = vcmp.eq.s32.totalorder %v347, %v391
        %vm435 = vcmp.eq.s32.totalorder %v347, %v395
        %vm436 = vcmp.eq.s32.totalorder %v348, %v391
        %vm437 = vcmp.eq.s32.totalorder %v348, %v395
        %vm438 = vcmp.eq.s32.totalorder %v349, %v391
        %vm439 = vcmp.eq.s32.totalorder %v349, %v395
        %vm440 = vcmp.eq.s32.totalorder %v350, %v391
        %vm441 = vcmp.eq.s32.totalorder %v350, %v395
        %vm442 = vcmp.eq.s32.totalorder %v351, %v391
        %vm443 = vcmp.eq.s32.totalorder %v351, %v395
        %vm444 = vcmp.eq.s32.totalorder %v352, %v391
        %vm445 = vcmp.eq.s32.totalorder %v352, %v395
        %vm446 = vcmp.eq.s32.totalorder %v353, %v391
        %vm447 = vcmp.eq.s32.totalorder %v353, %v395
        %vm448 = vcmp.eq.s32.totalorder %v354, %v391
        %vm449 = vcmp.eq.s32.totalorder %v354, %v395
        %vm450 = vcmp.eq.s32.totalorder %v355, %v391
        %vm451 = vcmp.eq.s32.totalorder %v355, %v395
        %vm452 = vcmp.eq.s32.totalorder %v356, %v391
        %vm453 = vcmp.eq.s32.totalorder %v356, %v395
        %vm454 = vcmp.eq.s32.totalorder %v357, %v391
        %vm455 = vcmp.eq.s32.totalorder %v357, %v395
        %vm456 = vcmp.eq.s32.totalorder %v358, %v391
        %vm457 = vcmp.eq.s32.totalorder %v358, %v395
        %vm458 = vcmp.eq.s32.totalorder %v359, %v391
        %vm459 = vcmp.eq.s32.totalorder %v359, %v395
        %v461 = vlaneseq
        %v462 = vshrl.u32 %v461, 7
        %v463 = vsub.s32 1, %v462
        %v464 = vrot.slane %v376, %v463
        %v465 = vlaneseq
        %v466 = vshrl.u32 %v465, 7
        %v467 = vsub.s32 5, %v466
        %v468 = vrot.slane %v376, %v467
        %v471 = vlaneseq
        %v472 = vshrl.u32 %v471, 7
        %v473 = vsub.s32 1, %v472
        %v474 = vrot.slane %v464, %v473
        %v475 = vlaneseq
        %v476 = vshrl.u32 %v475, 7
        %v477 = vsub.s32 1, %v476
        %v478 = vrot.slane %v468, %v477
        %v479 = vsel %vm396, %v474, 0.0
        %v480 = vsel %vm397, %v478, 0.0
        %v481 = vsel %vm398, %v474, 0.0
        %v482 = vsel %vm399, %v478, 0.0
        %v483 = vsel %vm400, %v474, 0.0
        %v484 = vsel %vm401, %v478, 0.0
        %v485 = vsel %vm402, %v474, 0.0
        %v486 = vsel %vm403, %v478, 0.0
        %v487 = vsel %vm404, %v474, 0.0
        %v488 = vsel %vm405, %v478, 0.0
        %v489 = vsel %vm406, %v474, 0.0
        %v490 = vsel %vm407, %v478, 0.0
        %v491 = vsel %vm408, %v474, 0.0
        %v492 = vsel %vm409, %v478, 0.0
        %v493 = vsel %vm410, %v474, 0.0
        %v494 = vsel %vm411, %v478, 0.0
        %v495 = vsel %vm412, %v474, 0.0
        %v496 = vsel %vm413, %v478, 0.0
        %v497 = vsel %vm414, %v474, 0.0
        %v498 = vsel %vm415, %v478, 0.0
        %v499 = vsel %vm416, %v474, 0.0
        %v500 = vsel %vm417, %v478, 0.0
        %v501 = vsel %vm418, %v474, 0.0
        %v502 = vsel %vm419, %v478, 0.0
        %v503 = vsel %vm420, %v474, 0.0
        %v504 = vsel %vm421, %v478, 0.0
        %v505 = vsel %vm422, %v474, 0.0
        %v506 = vsel %vm423, %v478, 0.0
        %v507 = vsel %vm424, %v474, 0.0
        %v508 = vsel %vm425, %v478, 0.0
        %v509 = vsel %vm426, %v474, 0.0
        %v510 = vsel %vm427, %v478, 0.0
        %v511 = vsel %vm428, %v474, 0.0
        %v512 = vsel %vm429, %v478, 0.0
        %v513 = vsel %vm430, %v474, 0.0
        %v514 = vsel %vm431, %v478, 0.0
        %v515 = vsel %vm432, %v474, 0.0
        %v516 = vsel %vm433, %v478, 0.0
        %v517 = vsel %vm434, %v474, 0.0
        %v518 = vsel %vm435, %v478, 0.0
        %v519 = vsel %vm436, %v474, 0.0
        %v520 = vsel %vm437, %v478, 0.0
        %v521 = vsel %vm438, %v474, 0.0
        %v522 = vsel %vm439, %v478, 0.0
        %v523 = vsel %vm440, %v474, 0.0
        %v524 = vsel %vm441, %v478, 0.0
        %v525 = vsel %vm442, %v474, 0.0
        %v526 = vsel %vm443, %v478, 0.0
        %v527 = vsel %vm444, %v474, 0.0
        %v528 = vsel %vm445, %v478, 0.0
        %v529 = vsel %vm446, %v474, 0.0
        %v530 = vsel %vm447, %v478, 0.0
        %v531 = vsel %vm448, %v474, 0.0
        %v532 = vsel %vm449, %v478, 0.0
        %v533 = vsel %vm450, %v474, 0.0
        %v534 = vsel %vm451, %v478, 0.0
        %v535 = vsel %vm452, %v474, 0.0
        %v536 = vsel %vm453, %v478, 0.0
        %v537 = vsel %vm454, %v474, 0.0
        %v538 = vsel %vm455, %v478, 0.0
        %v539 = vsel %vm456, %v474, 0.0
        %v540 = vsel %vm457, %v478, 0.0
        %v541 = vsel %vm458, %v474, 0.0
        %v542 = vsel %vm459, %v478, 0.0
        %v543 = vadd.s32 %v283, 1
        %vm544 = vcmp.ge.s32.totalorder %v543, 0
        %v545 = vsel %vm544, 1, 0
        %v546 = vrot.slane %v545, 7
        %vm547 = vcmp.ne.s32.totalorder %v546, 0
        %vm548 = vmand %vm363, %vm547
        %vm549 = vcmp.lt.s32.totalorder %v543, 16
        %v550 = vsel %vm549, 1, 0
        %v551 = vrot.slane %v550, 7
        %vm552 = vcmp.ne.s32.totalorder %v551, 0
        %vm553 = vmand %vm548, %vm552
        %v555 = vrot.slane %v282, 7
        %v557 = vmul.f32 %v360, %v555
        %v558 = vsel %vm553, %v557, 0.0
        %v559 = vrot.slane %v543, 7
        %v560 = vadd.s32 %v377, %v559
        %v561 = vlaneseq
        %v562 = vshrl.u32 %v561, 7
        %v563 = vsub.s32 1, %v562
        %v564 = vrot.slane %v560, %v563
        %v565 = vlaneseq
        %v566 = vshrl.u32 %v565, 7
        %v567 = vsub.s32 5, %v566
        %v568 = vrot.slane %v560, %v567
        %v569 = vlaneseq
        %v570 = vshrl.u32 %v569, 7
        %v571 = vsub.s32 1, %v570
        %v572 = vrot.slane %v564, %v571
        %v573 = vlaneseq
        %v574 = vshrl.u32 %v573, 7
        %v575 = vsub.s32 1, %v574
        %v576 = vrot.slane %v568, %v575
        %vm577 = vcmp.eq.s32.totalorder %v328, %v572
        %vm578 = vcmp.eq.s32.totalorder %v328, %v576
        %vm579 = vcmp.eq.s32.totalorder %v329, %v572
        %vm580 = vcmp.eq.s32.totalorder %v329, %v576
        %vm581 = vcmp.eq.s32.totalorder %v330, %v572
        %vm582 = vcmp.eq.s32.totalorder %v330, %v576
        %vm583 = vcmp.eq.s32.totalorder %v331, %v572
        %vm584 = vcmp.eq.s32.totalorder %v331, %v576
        %vm585 = vcmp.eq.s32.totalorder %v332, %v572
        %vm586 = vcmp.eq.s32.totalorder %v332, %v576
        %vm587 = vcmp.eq.s32.totalorder %v333, %v572
        %vm588 = vcmp.eq.s32.totalorder %v333, %v576
        %vm589 = vcmp.eq.s32.totalorder %v334, %v572
        %vm590 = vcmp.eq.s32.totalorder %v334, %v576
        %vm591 = vcmp.eq.s32.totalorder %v335, %v572
        %vm592 = vcmp.eq.s32.totalorder %v335, %v576
        %vm593 = vcmp.eq.s32.totalorder %v336, %v572
        %vm594 = vcmp.eq.s32.totalorder %v336, %v576
        %vm595 = vcmp.eq.s32.totalorder %v337, %v572
        %vm596 = vcmp.eq.s32.totalorder %v337, %v576
        %vm597 = vcmp.eq.s32.totalorder %v338, %v572
        %vm598 = vcmp.eq.s32.totalorder %v338, %v576
        %vm599 = vcmp.eq.s32.totalorder %v339, %v572
        %vm600 = vcmp.eq.s32.totalorder %v339, %v576
        %vm601 = vcmp.eq.s32.totalorder %v340, %v572
        %vm602 = vcmp.eq.s32.totalorder %v340, %v576
        %vm603 = vcmp.eq.s32.totalorder %v341, %v572
        %vm604 = vcmp.eq.s32.totalorder %v341, %v576
        %vm605 = vcmp.eq.s32.totalorder %v342, %v572
        %vm606 = vcmp.eq.s32.totalorder %v342, %v576
        %vm607 = vcmp.eq.s32.totalorder %v343, %v572
        %vm608 = vcmp.eq.s32.totalorder %v343, %v576
        %vm609 = vcmp.eq.s32.totalorder %v344, %v572
        %vm610 = vcmp.eq.s32.totalorder %v344, %v576
        %vm611 = vcmp.eq.s32.totalorder %v345, %v572
        %vm612 = vcmp.eq.s32.totalorder %v345, %v576
        %vm613 = vcmp.eq.s32.totalorder %v346, %v572
        %vm614 = vcmp.eq.s32.totalorder %v346, %v576
        %vm615 = vcmp.eq.s32.totalorder %v347, %v572
        %vm616 = vcmp.eq.s32.totalorder %v347, %v576
        %vm617 = vcmp.eq.s32.totalorder %v348, %v572
        %vm618 = vcmp.eq.s32.totalorder %v348, %v576
        %vm619 = vcmp.eq.s32.totalorder %v349, %v572
        %vm620 = vcmp.eq.s32.totalorder %v349, %v576
        %vm621 = vcmp.eq.s32.totalorder %v350, %v572
        %vm622 = vcmp.eq.s32.totalorder %v350, %v576
        %vm623 = vcmp.eq.s32.totalorder %v351, %v572
        %vm624 = vcmp.eq.s32.totalorder %v351, %v576
        %vm625 = vcmp.eq.s32.totalorder %v352, %v572
        %vm626 = vcmp.eq.s32.totalorder %v352, %v576
        %vm627 = vcmp.eq.s32.totalorder %v353, %v572
        %vm628 = vcmp.eq.s32.totalorder %v353, %v576
        %vm629 = vcmp.eq.s32.totalorder %v354, %v572
        %vm630 = vcmp.eq.s32.totalorder %v354, %v576
        %vm631 = vcmp.eq.s32.totalorder %v355, %v572
        %vm632 = vcmp.eq.s32.totalorder %v355, %v576
        %vm633 = vcmp.eq.s32.totalorder %v356, %v572
        %vm634 = vcmp.eq.s32.totalorder %v356, %v576
        %vm635 = vcmp.eq.s32.totalorder %v357, %v572
        %vm636 = vcmp.eq.s32.totalorder %v357, %v576
        %vm637 = vcmp.eq.s32.totalorder %v358, %v572
        %vm638 = vcmp.eq.s32.totalorder %v358, %v576
        %vm639 = vcmp.eq.s32.totalorder %v359, %v572
        %vm640 = vcmp.eq.s32.totalorder %v359, %v576
        %v642 = vlaneseq
        %v643 = vshrl.u32 %v642, 7
        %v644 = vsub.s32 1, %v643
        %v645 = vrot.slane %v558, %v644
        %v646 = vlaneseq
        %v647 = vshrl.u32 %v646, 7
        %v648 = vsub.s32 5, %v647
        %v649 = vrot.slane %v558, %v648
        %v652 = vlaneseq
        %v653 = vshrl.u32 %v652, 7
        %v654 = vsub.s32 1, %v653
        %v655 = vrot.slane %v645, %v654
        %v656 = vlaneseq
        %v657 = vshrl.u32 %v656, 7
        %v658 = vsub.s32 1, %v657
        %v659 = vrot.slane %v649, %v658
        %v660 = vsel %vm577, %v655, 0.0
        %v661 = vsel %vm578, %v659, 0.0
        %v662 = vsel %vm579, %v655, 0.0
        %v663 = vsel %vm580, %v659, 0.0
        %v664 = vsel %vm581, %v655, 0.0
        %v665 = vsel %vm582, %v659, 0.0
        %v666 = vsel %vm583, %v655, 0.0
        %v667 = vsel %vm584, %v659, 0.0
        %v668 = vsel %vm585, %v655, 0.0
        %v669 = vsel %vm586, %v659, 0.0
        %v670 = vsel %vm587, %v655, 0.0
        %v671 = vsel %vm588, %v659, 0.0
        %v672 = vsel %vm589, %v655, 0.0
        %v673 = vsel %vm590, %v659, 0.0
        %v674 = vsel %vm591, %v655, 0.0
        %v675 = vsel %vm592, %v659, 0.0
        %v676 = vsel %vm593, %v655, 0.0
        %v677 = vsel %vm594, %v659, 0.0
        %v678 = vsel %vm595, %v655, 0.0
        %v679 = vsel %vm596, %v659, 0.0
        %v680 = vsel %vm597, %v655, 0.0
        %v681 = vsel %vm598, %v659, 0.0
        %v682 = vsel %vm599, %v655, 0.0
        %v683 = vsel %vm600, %v659, 0.0
        %v684 = vsel %vm601, %v655, 0.0
        %v685 = vsel %vm602, %v659, 0.0
        %v686 = vsel %vm603, %v655, 0.0
        %v687 = vsel %vm604, %v659, 0.0
        %v688 = vsel %vm605, %v655, 0.0
        %v689 = vsel %vm606, %v659, 0.0
        %v690 = vsel %vm607, %v655, 0.0
        %v691 = vsel %vm608, %v659, 0.0
        %v692 = vsel %vm609, %v655, 0.0
        %v693 = vsel %vm610, %v659, 0.0
        %v694 = vsel %vm611, %v655, 0.0
        %v695 = vsel %vm612, %v659, 0.0
        %v696 = vsel %vm613, %v655, 0.0
        %v697 = vsel %vm614, %v659, 0.0
        %v698 = vsel %vm615, %v655, 0.0
        %v699 = vsel %vm616, %v659, 0.0
        %v700 = vsel %vm617, %v655, 0.0
        %v701 = vsel %vm618, %v659, 0.0
        %v702 = vsel %vm619, %v655, 0.0
        %v703 = vsel %vm620, %v659, 0.0
        %v704 = vsel %vm621, %v655, 0.0
        %v705 = vsel %vm622, %v659, 0.0
        %v706 = vsel %vm623, %v655, 0.0
        %v707 = vsel %vm624, %v659, 0.0
        %v708 = vsel %vm625, %v655, 0.0
        %v709 = vsel %vm626, %v659, 0.0
        %v710 = vsel %vm627, %v655, 0.0
        %v711 = vsel %vm628, %v659, 0.0
        %v712 = vsel %vm629, %v655, 0.0
        %v713 = vsel %vm630, %v659, 0.0
        %v714 = vsel %vm631, %v655, 0.0
        %v715 = vsel %vm632, %v659, 0.0
        %v716 = vsel %vm633, %v655, 0.0
        %v717 = vsel %vm634, %v659, 0.0
        %v718 = vsel %vm635, %v655, 0.0
        %v719 = vsel %vm636, %v659, 0.0
        %v720 = vsel %vm637, %v655, 0.0
        %v721 = vsel %vm638, %v659, 0.0
        %v722 = vsel %vm639, %v655, 0.0
        %v723 = vsel %vm640, %v659, 0.0
        %v724 = vadd.f32 %v479, %v660
        %v725 = vadd.f32 %v480, %v661
        %v726 = vadd.f32 %v481, %v662
        %v727 = vadd.f32 %v482, %v663
        %v728 = vadd.f32 %v483, %v664
        %v729 = vadd.f32 %v484, %v665
        %v730 = vadd.f32 %v485, %v666
        %v731 = vadd.f32 %v486, %v667
        %v732 = vadd.f32 %v487, %v668
        %v733 = vadd.f32 %v488, %v669
        %v734 = vadd.f32 %v489, %v670
        %v735 = vadd.f32 %v490, %v671
        %v736 = vadd.f32 %v491, %v672
        %v737 = vadd.f32 %v492, %v673
        %v738 = vadd.f32 %v493, %v674
        %v739 = vadd.f32 %v494, %v675
        %v740 = vadd.f32 %v495, %v676
        %v741 = vadd.f32 %v496, %v677
        %v742 = vadd.f32 %v497, %v678
        %v743 = vadd.f32 %v498, %v679
        %v744 = vadd.f32 %v499, %v680
        %v745 = vadd.f32 %v500, %v681
        %v746 = vadd.f32 %v501, %v682
        %v747 = vadd.f32 %v502, %v683
        %v748 = vadd.f32 %v503, %v684
        %v749 = vadd.f32 %v504, %v685
        %v750 = vadd.f32 %v505, %v686
        %v751 = vadd.f32 %v506, %v687
        %v752 = vadd.f32 %v507, %v688
        %v753 = vadd.f32 %v508, %v689
        %v754 = vadd.f32 %v509, %v690
        %v755 = vadd.f32 %v510, %v691
        %v756 = vadd.f32 %v511, %v692
        %v757 = vadd.f32 %v512, %v693
        %v758 = vadd.f32 %v513, %v694
        %v759 = vadd.f32 %v514, %v695
        %v760 = vadd.f32 %v515, %v696
        %v761 = vadd.f32 %v516, %v697
        %v762 = vadd.f32 %v517, %v698
        %v763 = vadd.f32 %v518, %v699
        %v764 = vadd.f32 %v519, %v700
        %v765 = vadd.f32 %v520, %v701
        %v766 = vadd.f32 %v521, %v702
        %v767 = vadd.f32 %v522, %v703
        %v768 = vadd.f32 %v523, %v704
        %v769 = vadd.f32 %v524, %v705
        %v770 = vadd.f32 %v525, %v706
        %v771 = vadd.f32 %v526, %v707
        %v772 = vadd.f32 %v527, %v708
        %v773 = vadd.f32 %v528, %v709
        %v774 = vadd.f32 %v529, %v710
        %v775 = vadd.f32 %v530, %v711
        %v776 = vadd.f32 %v531, %v712
        %v777 = vadd.f32 %v532, %v713
        %v778 = vadd.f32 %v533, %v714
        %v779 = vadd.f32 %v534, %v715
        %v780 = vadd.f32 %v535, %v716
        %v781 = vadd.f32 %v536, %v717
        %v782 = vadd.f32 %v537, %v718
        %v783 = vadd.f32 %v538, %v719
        %v784 = vadd.f32 %v539, %v720
        %v785 = vadd.f32 %v540, %v721
        %v786 = vadd.f32 %v541, %v722
        %v787 = vadd.f32 %v542, %v723
        %vm788 = vmand %vm544, %vm549
        %vm789 = vmand %vm788, %vm366
        %vm790 = vmand %vm789, %vm370
        %v791 = vmul.f32 %v282, %v373
        %v792 = vsel %vm790, %v791, 0.0
        %v793 = vmul.u32 %v543, 16
        %v794 = vadd.s32 %v793, %v378
        %v795 = vlaneseq
        %v796 = vshrl.u32 %v795, 7
        %v797 = vsub.s32 1, %v796
        %v798 = vrot.slane %v794, %v797
        %v799 = vlaneseq
        %v800 = vshrl.u32 %v799, 7
        %v801 = vsub.s32 5, %v800
        %v802 = vrot.slane %v794, %v801
        %v803 = vlaneseq
        %v804 = vshrl.u32 %v803, 7
        %v805 = vsub.s32 1, %v804
        %v806 = vrot.slane %v798, %v805
        %v807 = vlaneseq
        %v808 = vshrl.u32 %v807, 7
        %v809 = vsub.s32 1, %v808
        %v810 = vrot.slane %v802, %v809
        %vm811 = vcmp.eq.s32.totalorder %v328, %v806
        %vm812 = vcmp.eq.s32.totalorder %v328, %v810
        %vm813 = vcmp.eq.s32.totalorder %v329, %v806
        %vm814 = vcmp.eq.s32.totalorder %v329, %v810
        %vm815 = vcmp.eq.s32.totalorder %v330, %v806
        %vm816 = vcmp.eq.s32.totalorder %v330, %v810
        %vm817 = vcmp.eq.s32.totalorder %v331, %v806
        %vm818 = vcmp.eq.s32.totalorder %v331, %v810
        %vm819 = vcmp.eq.s32.totalorder %v332, %v806
        %vm820 = vcmp.eq.s32.totalorder %v332, %v810
        %vm821 = vcmp.eq.s32.totalorder %v333, %v806
        %vm822 = vcmp.eq.s32.totalorder %v333, %v810
        %vm823 = vcmp.eq.s32.totalorder %v334, %v806
        %vm824 = vcmp.eq.s32.totalorder %v334, %v810
        %vm825 = vcmp.eq.s32.totalorder %v335, %v806
        %vm826 = vcmp.eq.s32.totalorder %v335, %v810
        %vm827 = vcmp.eq.s32.totalorder %v336, %v806
        %vm828 = vcmp.eq.s32.totalorder %v336, %v810
        %vm829 = vcmp.eq.s32.totalorder %v337, %v806
        %vm830 = vcmp.eq.s32.totalorder %v337, %v810
        %vm831 = vcmp.eq.s32.totalorder %v338, %v806
        %vm832 = vcmp.eq.s32.totalorder %v338, %v810
        %vm833 = vcmp.eq.s32.totalorder %v339, %v806
        %vm834 = vcmp.eq.s32.totalorder %v339, %v810
        %vm835 = vcmp.eq.s32.totalorder %v340, %v806
        %vm836 = vcmp.eq.s32.totalorder %v340, %v810
        %vm837 = vcmp.eq.s32.totalorder %v341, %v806
        %vm838 = vcmp.eq.s32.totalorder %v341, %v810
        %vm839 = vcmp.eq.s32.totalorder %v342, %v806
        %vm840 = vcmp.eq.s32.totalorder %v342, %v810
        %vm841 = vcmp.eq.s32.totalorder %v343, %v806
        %vm842 = vcmp.eq.s32.totalorder %v343, %v810
        %vm843 = vcmp.eq.s32.totalorder %v344, %v806
        %vm844 = vcmp.eq.s32.totalorder %v344, %v810
        %vm845 = vcmp.eq.s32.totalorder %v345, %v806
        %vm846 = vcmp.eq.s32.totalorder %v345, %v810
        %vm847 = vcmp.eq.s32.totalorder %v346, %v806
        %vm848 = vcmp.eq.s32.totalorder %v346, %v810
        %vm849 = vcmp.eq.s32.totalorder %v347, %v806
        %vm850 = vcmp.eq.s32.totalorder %v347, %v810
        %vm851 = vcmp.eq.s32.totalorder %v348, %v806
        %vm852 = vcmp.eq.s32.totalorder %v348, %v810
        %vm853 = vcmp.eq.s32.totalorder %v349, %v806
        %vm854 = vcmp.eq.s32.totalorder %v349, %v810
        %vm855 = vcmp.eq.s32.totalorder %v350, %v806
        %vm856 = vcmp.eq.s32.totalorder %v350, %v810
        %vm857 = vcmp.eq.s32.totalorder %v351, %v806
        %vm858 = vcmp.eq.s32.totalorder %v351, %v810
        %vm859 = vcmp.eq.s32.totalorder %v352, %v806
        %vm860 = vcmp.eq.s32.totalorder %v352, %v810
        %vm861 = vcmp.eq.s32.totalorder %v353, %v806
        %vm862 = vcmp.eq.s32.totalorder %v353, %v810
        %vm863 = vcmp.eq.s32.totalorder %v354, %v806
        %vm864 = vcmp.eq.s32.totalorder %v354, %v810
        %vm865 = vcmp.eq.s32.totalorder %v355, %v806
        %vm866 = vcmp.eq.s32.totalorder %v355, %v810
        %vm867 = vcmp.eq.s32.totalorder %v356, %v806
        %vm868 = vcmp.eq.s32.totalorder %v356, %v810
        %vm869 = vcmp.eq.s32.totalorder %v357, %v806
        %vm870 = vcmp.eq.s32.totalorder %v357, %v810
        %vm871 = vcmp.eq.s32.totalorder %v358, %v806
        %vm872 = vcmp.eq.s32.totalorder %v358, %v810
        %vm873 = vcmp.eq.s32.totalorder %v359, %v806
        %vm874 = vcmp.eq.s32.totalorder %v359, %v810
        %v876 = vlaneseq
        %v877 = vshrl.u32 %v876, 7
        %v878 = vsub.s32 1, %v877
        %v879 = vrot.slane %v792, %v878
        %v880 = vlaneseq
        %v881 = vshrl.u32 %v880, 7
        %v882 = vsub.s32 5, %v881
        %v883 = vrot.slane %v792, %v882
        %v886 = vlaneseq
        %v887 = vshrl.u32 %v886, 7
        %v888 = vsub.s32 1, %v887
        %v889 = vrot.slane %v879, %v888
        %v890 = vlaneseq
        %v891 = vshrl.u32 %v890, 7
        %v892 = vsub.s32 1, %v891
        %v893 = vrot.slane %v883, %v892
        %v894 = vsel %vm811, %v889, 0.0
        %v895 = vsel %vm812, %v893, 0.0
        %v896 = vsel %vm813, %v889, 0.0
        %v897 = vsel %vm814, %v893, 0.0
        %v898 = vsel %vm815, %v889, 0.0
        %v899 = vsel %vm816, %v893, 0.0
        %v900 = vsel %vm817, %v889, 0.0
        %v901 = vsel %vm818, %v893, 0.0
        %v902 = vsel %vm819, %v889, 0.0
        %v903 = vsel %vm820, %v893, 0.0
        %v904 = vsel %vm821, %v889, 0.0
        %v905 = vsel %vm822, %v893, 0.0
        %v906 = vsel %vm823, %v889, 0.0
        %v907 = vsel %vm824, %v893, 0.0
        %v908 = vsel %vm825, %v889, 0.0
        %v909 = vsel %vm826, %v893, 0.0
        %v910 = vsel %vm827, %v889, 0.0
        %v911 = vsel %vm828, %v893, 0.0
        %v912 = vsel %vm829, %v889, 0.0
        %v913 = vsel %vm830, %v893, 0.0
        %v914 = vsel %vm831, %v889, 0.0
        %v915 = vsel %vm832, %v893, 0.0
        %v916 = vsel %vm833, %v889, 0.0
        %v917 = vsel %vm834, %v893, 0.0
        %v918 = vsel %vm835, %v889, 0.0
        %v919 = vsel %vm836, %v893, 0.0
        %v920 = vsel %vm837, %v889, 0.0
        %v921 = vsel %vm838, %v893, 0.0
        %v922 = vsel %vm839, %v889, 0.0
        %v923 = vsel %vm840, %v893, 0.0
        %v924 = vsel %vm841, %v889, 0.0
        %v925 = vsel %vm842, %v893, 0.0
        %v926 = vsel %vm843, %v889, 0.0
        %v927 = vsel %vm844, %v893, 0.0
        %v928 = vsel %vm845, %v889, 0.0
        %v929 = vsel %vm846, %v893, 0.0
        %v930 = vsel %vm847, %v889, 0.0
        %v931 = vsel %vm848, %v893, 0.0
        %v932 = vsel %vm849, %v889, 0.0
        %v933 = vsel %vm850, %v893, 0.0
        %v934 = vsel %vm851, %v889, 0.0
        %v935 = vsel %vm852, %v893, 0.0
        %v936 = vsel %vm853, %v889, 0.0
        %v937 = vsel %vm854, %v893, 0.0
        %v938 = vsel %vm855, %v889, 0.0
        %v939 = vsel %vm856, %v893, 0.0
        %v940 = vsel %vm857, %v889, 0.0
        %v941 = vsel %vm858, %v893, 0.0
        %v942 = vsel %vm859, %v889, 0.0
        %v943 = vsel %vm860, %v893, 0.0
        %v944 = vsel %vm861, %v889, 0.0
        %v945 = vsel %vm862, %v893, 0.0
        %v946 = vsel %vm863, %v889, 0.0
        %v947 = vsel %vm864, %v893, 0.0
        %v948 = vsel %vm865, %v889, 0.0
        %v949 = vsel %vm866, %v893, 0.0
        %v950 = vsel %vm867, %v889, 0.0
        %v951 = vsel %vm868, %v893, 0.0
        %v952 = vsel %vm869, %v889, 0.0
        %v953 = vsel %vm870, %v893, 0.0
        %v954 = vsel %vm871, %v889, 0.0
        %v955 = vsel %vm872, %v893, 0.0
        %v956 = vsel %vm873, %v889, 0.0
        %v957 = vsel %vm874, %v893, 0.0
        %v958 = vadd.f32 %v724, %v894
        %v959 = vadd.f32 %v725, %v895
        %v960 = vadd.f32 %v726, %v896
        %v961 = vadd.f32 %v727, %v897
        %v962 = vadd.f32 %v728, %v898
        %v963 = vadd.f32 %v729, %v899
        %v964 = vadd.f32 %v730, %v900
        %v965 = vadd.f32 %v731, %v901
        %v966 = vadd.f32 %v732, %v902
        %v967 = vadd.f32 %v733, %v903
        %v968 = vadd.f32 %v734, %v904
        %v969 = vadd.f32 %v735, %v905
        %v970 = vadd.f32 %v736, %v906
        %v971 = vadd.f32 %v737, %v907
        %v972 = vadd.f32 %v738, %v908
        %v973 = vadd.f32 %v739, %v909
        %v974 = vadd.f32 %v740, %v910
        %v975 = vadd.f32 %v741, %v911
        %v976 = vadd.f32 %v742, %v912
        %v977 = vadd.f32 %v743, %v913
        %v978 = vadd.f32 %v744, %v914
        %v979 = vadd.f32 %v745, %v915
        %v980 = vadd.f32 %v746, %v916
        %v981 = vadd.f32 %v747, %v917
        %v982 = vadd.f32 %v748, %v918
        %v983 = vadd.f32 %v749, %v919
        %v984 = vadd.f32 %v750, %v920
        %v985 = vadd.f32 %v751, %v921
        %v986 = vadd.f32 %v752, %v922
        %v987 = vadd.f32 %v753, %v923
        %v988 = vadd.f32 %v754, %v924
        %v989 = vadd.f32 %v755, %v925
        %v990 = vadd.f32 %v756, %v926
        %v991 = vadd.f32 %v757, %v927
        %v992 = vadd.f32 %v758, %v928
        %v993 = vadd.f32 %v759, %v929
        %v994 = vadd.f32 %v760, %v930
        %v995 = vadd.f32 %v761, %v931
        %v996 = vadd.f32 %v762, %v932
        %v997 = vadd.f32 %v763, %v933
        %v998 = vadd.f32 %v764, %v934
        %v999 = vadd.f32 %v765, %v935
        %v1000 = vadd.f32 %v766, %v936
        %v1001 = vadd.f32 %v767, %v937
        %v1002 = vadd.f32 %v768, %v938
        %v1003 = vadd.f32 %v769, %v939
        %v1004 = vadd.f32 %v770, %v940
        %v1005 = vadd.f32 %v771, %v941
        %v1006 = vadd.f32 %v772, %v942
        %v1007 = vadd.f32 %v773, %v943
        %v1008 = vadd.f32 %v774, %v944
        %v1009 = vadd.f32 %v775, %v945
        %v1010 = vadd.f32 %v776, %v946
        %v1011 = vadd.f32 %v777, %v947
        %v1012 = vadd.f32 %v778, %v948
        %v1013 = vadd.f32 %v779, %v949
        %v1014 = vadd.f32 %v780, %v950
        %v1015 = vadd.f32 %v781, %v951
        %v1016 = vadd.f32 %v782, %v952
        %v1017 = vadd.f32 %v783, %v953
        %v1018 = vadd.f32 %v784, %v954
        %v1019 = vadd.f32 %v785, %v955
        %v1020 = vadd.f32 %v786, %v956
        %v1021 = vadd.f32 %v787, %v957
        %vm1022 = vmand %vm788, %vm547
        %vm1023 = vmand %vm1022, %vm552
        %v1024 = vmul.f32 %v282, %v555
        %v1025 = vsel %vm1023, %v1024, 0.0
        %v1026 = vadd.s32 %v793, %v559
        %v1027 = vlaneseq
        %v1028 = vshrl.u32 %v1027, 7
        %v1029 = vsub.s32 1, %v1028
        %v1030 = vrot.slane %v1026, %v1029
        %v1031 = vlaneseq
        %v1032 = vshrl.u32 %v1031, 7
        %v1033 = vsub.s32 5, %v1032
        %v1034 = vrot.slane %v1026, %v1033
        %v1035 = vlaneseq
        %v1036 = vshrl.u32 %v1035, 7
        %v1037 = vsub.s32 1, %v1036
        %v1038 = vrot.slane %v1030, %v1037
        %v1039 = vlaneseq
        %v1040 = vshrl.u32 %v1039, 7
        %v1041 = vsub.s32 1, %v1040
        %v1042 = vrot.slane %v1034, %v1041
        %vm1043 = vcmp.eq.s32.totalorder %v328, %v1038
        %vm1044 = vcmp.eq.s32.totalorder %v328, %v1042
        %vm1045 = vcmp.eq.s32.totalorder %v329, %v1038
        %vm1046 = vcmp.eq.s32.totalorder %v329, %v1042
        %vm1047 = vcmp.eq.s32.totalorder %v330, %v1038
        %vm1048 = vcmp.eq.s32.totalorder %v330, %v1042
        %vm1049 = vcmp.eq.s32.totalorder %v331, %v1038
        %vm1050 = vcmp.eq.s32.totalorder %v331, %v1042
        %vm1051 = vcmp.eq.s32.totalorder %v332, %v1038
        %vm1052 = vcmp.eq.s32.totalorder %v332, %v1042
        %vm1053 = vcmp.eq.s32.totalorder %v333, %v1038
        %vm1054 = vcmp.eq.s32.totalorder %v333, %v1042
        %vm1055 = vcmp.eq.s32.totalorder %v334, %v1038
        %vm1056 = vcmp.eq.s32.totalorder %v334, %v1042
        %vm1057 = vcmp.eq.s32.totalorder %v335, %v1038
        %vm1058 = vcmp.eq.s32.totalorder %v335, %v1042
        %vm1059 = vcmp.eq.s32.totalorder %v336, %v1038
        %vm1060 = vcmp.eq.s32.totalorder %v336, %v1042
        %vm1061 = vcmp.eq.s32.totalorder %v337, %v1038
        %vm1062 = vcmp.eq.s32.totalorder %v337, %v1042
        %vm1063 = vcmp.eq.s32.totalorder %v338, %v1038
        %vm1064 = vcmp.eq.s32.totalorder %v338, %v1042
        %vm1065 = vcmp.eq.s32.totalorder %v339, %v1038
        %vm1066 = vcmp.eq.s32.totalorder %v339, %v1042
        %vm1067 = vcmp.eq.s32.totalorder %v340, %v1038
        %vm1068 = vcmp.eq.s32.totalorder %v340, %v1042
        %vm1069 = vcmp.eq.s32.totalorder %v341, %v1038
        %vm1070 = vcmp.eq.s32.totalorder %v341, %v1042
        %vm1071 = vcmp.eq.s32.totalorder %v342, %v1038
        %vm1072 = vcmp.eq.s32.totalorder %v342, %v1042
        %vm1073 = vcmp.eq.s32.totalorder %v343, %v1038
        %vm1074 = vcmp.eq.s32.totalorder %v343, %v1042
        %vm1075 = vcmp.eq.s32.totalorder %v344, %v1038
        %vm1076 = vcmp.eq.s32.totalorder %v344, %v1042
        %vm1077 = vcmp.eq.s32.totalorder %v345, %v1038
        %vm1078 = vcmp.eq.s32.totalorder %v345, %v1042
        %vm1079 = vcmp.eq.s32.totalorder %v346, %v1038
        %vm1080 = vcmp.eq.s32.totalorder %v346, %v1042
        %vm1081 = vcmp.eq.s32.totalorder %v347, %v1038
        %vm1082 = vcmp.eq.s32.totalorder %v347, %v1042
        %vm1083 = vcmp.eq.s32.totalorder %v348, %v1038
        %vm1084 = vcmp.eq.s32.totalorder %v348, %v1042
        %vm1085 = vcmp.eq.s32.totalorder %v349, %v1038
        %vm1086 = vcmp.eq.s32.totalorder %v349, %v1042
        %vm1087 = vcmp.eq.s32.totalorder %v350, %v1038
        %vm1088 = vcmp.eq.s32.totalorder %v350, %v1042
        %vm1089 = vcmp.eq.s32.totalorder %v351, %v1038
        %vm1090 = vcmp.eq.s32.totalorder %v351, %v1042
        %vm1091 = vcmp.eq.s32.totalorder %v352, %v1038
        %vm1092 = vcmp.eq.s32.totalorder %v352, %v1042
        %vm1093 = vcmp.eq.s32.totalorder %v353, %v1038
        %vm1094 = vcmp.eq.s32.totalorder %v353, %v1042
        %vm1095 = vcmp.eq.s32.totalorder %v354, %v1038
        %vm1096 = vcmp.eq.s32.totalorder %v354, %v1042
        %vm1097 = vcmp.eq.s32.totalorder %v355, %v1038
        %vm1098 = vcmp.eq.s32.totalorder %v355, %v1042
        %vm1099 = vcmp.eq.s32.totalorder %v356, %v1038
        %vm1100 = vcmp.eq.s32.totalorder %v356, %v1042
        %vm1101 = vcmp.eq.s32.totalorder %v357, %v1038
        %vm1102 = vcmp.eq.s32.totalorder %v357, %v1042
        %vm1103 = vcmp.eq.s32.totalorder %v358, %v1038
        %vm1104 = vcmp.eq.s32.totalorder %v358, %v1042
        %vm1105 = vcmp.eq.s32.totalorder %v359, %v1038
        %vm1106 = vcmp.eq.s32.totalorder %v359, %v1042
        %v1108 = vlaneseq
        %v1109 = vshrl.u32 %v1108, 7
        %v1110 = vsub.s32 1, %v1109
        %v1111 = vrot.slane %v1025, %v1110
        %v1112 = vlaneseq
        %v1113 = vshrl.u32 %v1112, 7
        %v1114 = vsub.s32 5, %v1113
        %v1115 = vrot.slane %v1025, %v1114
        %v1118 = vlaneseq
        %v1119 = vshrl.u32 %v1118, 7
        %v1120 = vsub.s32 1, %v1119
        %v1121 = vrot.slane %v1111, %v1120
        %v1122 = vlaneseq
        %v1123 = vshrl.u32 %v1122, 7
        %v1124 = vsub.s32 1, %v1123
        %v1125 = vrot.slane %v1115, %v1124
        %v1126 = vsel %vm1043, %v1121, 0.0
        %v1127 = vsel %vm1044, %v1125, 0.0
        %v1128 = vsel %vm1045, %v1121, 0.0
        %v1129 = vsel %vm1046, %v1125, 0.0
        %v1130 = vsel %vm1047, %v1121, 0.0
        %v1131 = vsel %vm1048, %v1125, 0.0
        %v1132 = vsel %vm1049, %v1121, 0.0
        %v1133 = vsel %vm1050, %v1125, 0.0
        %v1134 = vsel %vm1051, %v1121, 0.0
        %v1135 = vsel %vm1052, %v1125, 0.0
        %v1136 = vsel %vm1053, %v1121, 0.0
        %v1137 = vsel %vm1054, %v1125, 0.0
        %v1138 = vsel %vm1055, %v1121, 0.0
        %v1139 = vsel %vm1056, %v1125, 0.0
        %v1140 = vsel %vm1057, %v1121, 0.0
        %v1141 = vsel %vm1058, %v1125, 0.0
        %v1142 = vsel %vm1059, %v1121, 0.0
        %v1143 = vsel %vm1060, %v1125, 0.0
        %v1144 = vsel %vm1061, %v1121, 0.0
        %v1145 = vsel %vm1062, %v1125, 0.0
        %v1146 = vsel %vm1063, %v1121, 0.0
        %v1147 = vsel %vm1064, %v1125, 0.0
        %v1148 = vsel %vm1065, %v1121, 0.0
        %v1149 = vsel %vm1066, %v1125, 0.0
        %v1150 = vsel %vm1067, %v1121, 0.0
        %v1151 = vsel %vm1068, %v1125, 0.0
        %v1152 = vsel %vm1069, %v1121, 0.0
        %v1153 = vsel %vm1070, %v1125, 0.0
        %v1154 = vsel %vm1071, %v1121, 0.0
        %v1155 = vsel %vm1072, %v1125, 0.0
        %v1156 = vsel %vm1073, %v1121, 0.0
        %v1157 = vsel %vm1074, %v1125, 0.0
        %v1158 = vsel %vm1075, %v1121, 0.0
        %v1159 = vsel %vm1076, %v1125, 0.0
        %v1160 = vsel %vm1077, %v1121, 0.0
        %v1161 = vsel %vm1078, %v1125, 0.0
        %v1162 = vsel %vm1079, %v1121, 0.0
        %v1163 = vsel %vm1080, %v1125, 0.0
        %v1164 = vsel %vm1081, %v1121, 0.0
        %v1165 = vsel %vm1082, %v1125, 0.0
        %v1166 = vsel %vm1083, %v1121, 0.0
        %v1167 = vsel %vm1084, %v1125, 0.0
        %v1168 = vsel %vm1085, %v1121, 0.0
        %v1169 = vsel %vm1086, %v1125, 0.0
        %v1170 = vsel %vm1087, %v1121, 0.0
        %v1171 = vsel %vm1088, %v1125, 0.0
        %v1172 = vsel %vm1089, %v1121, 0.0
        %v1173 = vsel %vm1090, %v1125, 0.0
        %v1174 = vsel %vm1091, %v1121, 0.0
        %v1175 = vsel %vm1092, %v1125, 0.0
        %v1176 = vsel %vm1093, %v1121, 0.0
        %v1177 = vsel %vm1094, %v1125, 0.0
        %v1178 = vsel %vm1095, %v1121, 0.0
        %v1179 = vsel %vm1096, %v1125, 0.0
        %v1180 = vsel %vm1097, %v1121, 0.0
        %v1181 = vsel %vm1098, %v1125, 0.0
        %v1182 = vsel %vm1099, %v1121, 0.0
        %v1183 = vsel %vm1100, %v1125, 0.0
        %v1184 = vsel %vm1101, %v1121, 0.0
        %v1185 = vsel %vm1102, %v1125, 0.0
        %v1186 = vsel %vm1103, %v1121, 0.0
        %v1187 = vsel %vm1104, %v1125, 0.0
        %v1188 = vsel %vm1105, %v1121, 0.0
        %v1189 = vsel %vm1106, %v1125, 0.0
        %v1190 = vadd.f32 %v958, %v1126
        %v1191 = vadd.f32 %v959, %v1127
        %v1192 = vadd.f32 %v960, %v1128
        %v1193 = vadd.f32 %v961, %v1129
        %v1194 = vadd.f32 %v962, %v1130
        %v1195 = vadd.f32 %v963, %v1131
        %v1196 = vadd.f32 %v964, %v1132
        %v1197 = vadd.f32 %v965, %v1133
        %v1198 = vadd.f32 %v966, %v1134
        %v1199 = vadd.f32 %v967, %v1135
        %v1200 = vadd.f32 %v968, %v1136
        %v1201 = vadd.f32 %v969, %v1137
        %v1202 = vadd.f32 %v970, %v1138
        %v1203 = vadd.f32 %v971, %v1139
        %v1204 = vadd.f32 %v972, %v1140
        %v1205 = vadd.f32 %v973, %v1141
        %v1206 = vadd.f32 %v974, %v1142
        %v1207 = vadd.f32 %v975, %v1143
        %v1208 = vadd.f32 %v976, %v1144
        %v1209 = vadd.f32 %v977, %v1145
        %v1210 = vadd.f32 %v978, %v1146
        %v1211 = vadd.f32 %v979, %v1147
        %v1212 = vadd.f32 %v980, %v1148
        %v1213 = vadd.f32 %v981, %v1149
        %v1214 = vadd.f32 %v982, %v1150
        %v1215 = vadd.f32 %v983, %v1151
        %v1216 = vadd.f32 %v984, %v1152
        %v1217 = vadd.f32 %v985, %v1153
        %v1218 = vadd.f32 %v986, %v1154
        %v1219 = vadd.f32 %v987, %v1155
        %v1220 = vadd.f32 %v988, %v1156
        %v1221 = vadd.f32 %v989, %v1157
        %v1222 = vadd.f32 %v990, %v1158
        %v1223 = vadd.f32 %v991, %v1159
        %v1224 = vadd.f32 %v992, %v1160
        %v1225 = vadd.f32 %v993, %v1161
        %v1226 = vadd.f32 %v994, %v1162
        %v1227 = vadd.f32 %v995, %v1163
        %v1228 = vadd.f32 %v996, %v1164
        %v1229 = vadd.f32 %v997, %v1165
        %v1230 = vadd.f32 %v998, %v1166
        %v1231 = vadd.f32 %v999, %v1167
        %v1232 = vadd.f32 %v1000, %v1168
        %v1233 = vadd.f32 %v1001, %v1169
        %v1234 = vadd.f32 %v1002, %v1170
        %v1235 = vadd.f32 %v1003, %v1171
        %v1236 = vadd.f32 %v1004, %v1172
        %v1237 = vadd.f32 %v1005, %v1173
        %v1238 = vadd.f32 %v1006, %v1174
        %v1239 = vadd.f32 %v1007, %v1175
        %v1240 = vadd.f32 %v1008, %v1176
        %v1241 = vadd.f32 %v1009, %v1177
        %v1242 = vadd.f32 %v1010, %v1178
        %v1243 = vadd.f32 %v1011, %v1179
        %v1244 = vadd.f32 %v1012, %v1180
        %v1245 = vadd.f32 %v1013, %v1181
        %v1246 = vadd.f32 %v1014, %v1182
        %v1247 = vadd.f32 %v1015, %v1183
        %v1248 = vadd.f32 %v1016, %v1184
        %v1249 = vadd.f32 %v1017, %v1185
        %v1250 = vadd.f32 %v1018, %v1186
        %v1251 = vadd.f32 %v1019, %v1187
        %v1252 = vadd.f32 %v1020, %v1188
        %v1253 = vadd.f32 %v1021, %v1189
        %v1254 = vld [vmem:[%s217] sm:$0xff]
        %v1255 = vld [vmem:[%s217 + $0x8] sm:$0xff]
        %v1256 = vld [vmem:[%s217 + $0x10] sm:$0xff]
        %v1257 = vld [vmem:[%s217 + $0x18] sm:$0xff]
        %v1258 = vld [vmem:[%s217 + $0x20] sm:$0xff]
        %v1259 = vld [vmem:[%s217 + $0x28] sm:$0xff]
        %v1260 = vld [vmem:[%s217 + $0x30] sm:$0xff]
        %v1261 = vld [vmem:[%s217 + $0x38] sm:$0xff]
        %v1262 = vld [vmem:[#allocation2] sm:$0xff]
        %v1263 = vld [vmem:[#allocation2 + $0x8] sm:$0xff]
        %v1264 = vld [vmem:[#allocation2 + $0x10] sm:$0xff]
        %v1265 = vld [vmem:[#allocation2 + $0x18] sm:$0xff]
        %v1266 = vld [vmem:[#allocation2 + $0x20] sm:$0xff]
        %v1267 = vld [vmem:[#allocation2 + $0x28] sm:$0xff]
        %v1268 = vld [vmem:[#allocation2 + $0x30] sm:$0xff]
        %v1269 = vld [vmem:[#allocation2 + $0x38] sm:$0xff]
        %1270 = vmatprep.subr.mxu0 %v1191
        %1271 = vmatpush1.msra.mxu0 %v1190
        %1272 = vmatprep.subr.mxu0 %v1193
        %1273 = vmatpush1.msra.mxu0 %v1192
        %1274 = vmatprep.subr.mxu0 %v1195
        %1275 = vmatpush1.msra.mxu0 %v1194
        %1276 = vmatprep.subr.mxu0 %v1197
        %1277 = vmatpush1.msra.mxu0 %v1196
        %1278 = vmatprep.subr.mxu0 %v1199
        %1279 = vmatpush1.msra.mxu0 %v1198
        %1280 = vmatprep.subr.mxu0 %v1201
        %1281 = vmatpush1.msra.mxu0 %v1200
        %1282 = vmatprep.subr.mxu0 %v1203
        %1283 = vmatpush1.msra.mxu0 %v1202
        %1284 = vmatprep.subr.mxu0 %v1205
        %1285 = vmatpush1.msra.mxu0 %v1204
        %1286 = vmatprep.subr.mxu0 %v1207
        %1287 = vmatpush1.msra.mxu0 %v1206
        %1288 = vmatprep.subr.mxu0 %v1209
        %1289 = vmatpush1.msra.mxu0 %v1208
        %1290 = vmatprep.subr.mxu0 %v1211
        %1291 = vmatpush1.msra.mxu0 %v1210
        %1292 = vmatprep.subr.mxu0 %v1213
        %1293 = vmatpush1.msra.mxu0 %v1212
        %1294 = vmatprep.subr.mxu0 %v1215
        %1295 = vmatpush1.msra.mxu0 %v1214
        %1296 = vmatprep.subr.mxu0 %v1217
        %1297 = vmatpush1.msra.mxu0 %v1216
        %1298 = vmatprep.subr.mxu0 %v1219
        %1299 = vmatpush1.msra.mxu0 %v1218
        %1300 = vmatprep.subr.mxu0 %v1221
        %1301 = vmatpush1.msra.mxu0 %v1220
        %1302 = vmatprep.subr.mxu0 %v1223
        %1303 = vmatpush1.msra.mxu0 %v1222
        %1304 = vmatprep.subr.mxu0 %v1225
        %1305 = vmatpush1.msra.mxu0 %v1224
        %1306 = vmatprep.subr.mxu0 %v1227
        %1307 = vmatpush1.msra.mxu0 %v1226
        %1308 = vmatprep.subr.mxu0 %v1229
        %1309 = vmatpush1.msra.mxu0 %v1228
        %1310 = vmatprep.subr.mxu0 %v1231
        %1311 = vmatpush1.msra.mxu0 %v1230
        %1312 = vmatprep.subr.mxu0 %v1233
        %1313 = vmatpush1.msra.mxu0 %v1232
        %1314 = vmatprep.subr.mxu0 %v1235
        %1315 = vmatpush1.msra.mxu0 %v1234
        %1316 = vmatprep.subr.mxu0 %v1237
        %1317 = vmatpush1.msra.mxu0 %v1236
        %1318 = vmatprep.subr.mxu0 %v1239
        %1319 = vmatpush1.msra.mxu0 %v1238
        %1320 = vmatprep.subr.mxu0 %v1241
        %1321 = vmatpush1.msra.mxu0 %v1240
        %1322 = vmatprep.subr.mxu0 %v1243
        %1323 = vmatpush1.msra.mxu0 %v1242
        %1324 = vmatprep.subr.mxu0 %v1245
        %1325 = vmatpush1.msra.mxu0 %v1244
        %1326 = vmatprep.subr.mxu0 %v1247
        %1327 = vmatpush1.msra.mxu0 %v1246
        %1328 = vmatprep.subr.mxu0 %v1249
        %1329 = vmatpush1.msra.mxu0 %v1248
        %1330 = vmatprep.subr.mxu0 %v1251
        %1331 = vmatpush1.msra.mxu0 %v1250
        %1332 = vmatprep.subr.mxu0 %v1253
        %1333 = vmatpush1.msra.mxu0 %v1252
        %1334 = vmatprep.mubr.f32.mxu0 %v1255
        %1335 = vmatmul.mubr.f32.gmra.mrb[0].mxu0 %v1254
        %v1336 = vpop.f32.mrb[0].mxu0
        %v1337 = vadd.f32 0.0, %v1336
        %v1338 = vpop.f32.mrb[0].mxu0
        %v1339 = vadd.f32 0.0, %v1338
        %1340 = vmatprep.mubr.f32.mxu0 %v1257
        %1341 = vmatmul.mubr.f32.gmra.mrb[0].mxu0 %v1256
        %v1342 = vpop.f32.mrb[0].mxu0
        %v1343 = vadd.f32 0.0, %v1342
        %v1344 = vpop.f32.mrb[0].mxu0
        %v1345 = vadd.f32 0.0, %v1344
        %1346 = vmatprep.mubr.f32.mxu0 %v1259
        %1347 = vmatmul.mubr.f32.gmra.mrb[0].mxu0 %v1258
        %v1348 = vpop.f32.mrb[0].mxu0
        %v1349 = vadd.f32 0.0, %v1348
        %v1350 = vpop.f32.mrb[0].mxu0
        %v1351 = vadd.f32 0.0, %v1350
        %1352 = vmatprep.mubr.f32.mxu0 %v1261
        %1353 = vmatmul.mubr.f32.gmra.mrb[0].mxu0 %v1260
        %v1354 = vpop.f32.mrb[0].mxu0
        %v1355 = vadd.f32 0.0, %v1354
        %v1356 = vpop.f32.mrb[0].mxu0
        %v1357 = vadd.f32 0.0, %v1356
        %1358 = vdwg.mxu0
        %v1359 = vadd.f32 %v1262, %v1337
        %v1360 = vadd.f32 %v1263, %v1339
        %v1361 = vadd.f32 %v1264, %v1343
        %v1362 = vadd.f32 %v1265, %v1345
        %v1363 = vadd.f32 %v1266, %v1349
        %v1364 = vadd.f32 %v1267, %v1351
        %v1365 = vadd.f32 %v1268, %v1355
        %v1366 = vadd.f32 %v1269, %v1357
        %1367 = vst [vmem:[#allocation2] sm:$0xff] %v1359
        %1368 = vst [vmem:[#allocation2 + $0x8] sm:$0xff] %v1360
        %1369 = vst [vmem:[#allocation2 + $0x10] sm:$0xff] %v1361
        %1370 = vst [vmem:[#allocation2 + $0x18] sm:$0xff] %v1362
        %1371 = vst [vmem:[#allocation2 + $0x20] sm:$0xff] %v1363
        %1372 = vst [vmem:[#allocation2 + $0x28] sm:$0xff] %v1364
        %1373 = vst [vmem:[#allocation2 + $0x30] sm:$0xff] %v1365
        %1374 = vst [vmem:[#allocation2 + $0x38] sm:$0xff] %v1366
        // Predicated region
        $region37: #{tpu_custom_call.1} parent=27 // pred_check
          %p1375 = pneg %p268
        $region38: #{tpu_custom_call.1} parent=27 // pred_check_branch
          %1377 = sbr.rel (%p1375) target = $region40
        $region39: #{tpu_custom_call.1} parent=27 // pred_region
          %v1378 = vlaneseq
          %v1379 = vshrl.u32 %v1378, 7
          %v1380 = vsub.s32 2, %v1379
          %v1381 = vrot.slane %v283, %v1380
          %v1382 = vlaneseq
          %v1383 = vshrl.u32 %v1382, 7
          %v1384 = vsub.s32 6, %v1383
          %v1385 = vrot.slane %v283, %v1384
          %v1386 = vlaneseq
          %v1387 = vshrl.u32 %v1386, 7
          %v1388 = vsub.s32 2, %v1387
          %v1389 = vrot.slane %v1381, %v1388
          %v1390 = vlaneseq
          %v1391 = vshrl.u32 %v1390, 7
          %v1392 = vsub.s32 2, %v1391
          %v1393 = vrot.slane %v1385, %v1392
          %vm1394 = vcmp.eq.s32.totalorder %v295, %v1389
          %vm1395 = vcmp.eq.s32.totalorder %v295, %v1393
          %v1396 = vlaneseq
          %v1397 = vshrl.u32 %v1396, 7
          %v1398 = vsub.s32 2, %v1397
          %v1399 = vrot.slane %v360, %v1398
          %v1400 = vlaneseq
          %v1401 = vshrl.u32 %v1400, 7
          %v1402 = vsub.s32 6, %v1401
          %v1403 = vrot.slane %v360, %v1402
          %v1406 = vlaneseq
          %v1407 = vshrl.u32 %v1406, 7
          %v1408 = vsub.s32 2, %v1407
          %v1409 = vrot.slane %v1399, %v1408
          %v1410 = vlaneseq
          %v1411 = vshrl.u32 %v1410, 7
          %v1412 = vsub.s32 2, %v1411
          %v1413 = vrot.slane %v1403, %v1412
          %v1414 = vsel %vm1394, %v1409, 0.0
          %v1415 = vsel %vm1395, %v1413, 0.0
          %v1416 = vlaneseq
          %v1417 = vshrl.u32 %v1416, 7
          %v1418 = vsub.s32 2, %v1417
          %v1419 = vrot.slane %v543, %v1418
          %v1420 = vlaneseq
          %v1421 = vshrl.u32 %v1420, 7
          %v1422 = vsub.s32 6, %v1421
          %v1423 = vrot.slane %v543, %v1422
          %v1424 = vlaneseq
          %v1425 = vshrl.u32 %v1424, 7
          %v1426 = vsub.s32 2, %v1425
          %v1427 = vrot.slane %v1419, %v1426
          %v1428 = vlaneseq
          %v1429 = vshrl.u32 %v1428, 7
          %v1430 = vsub.s32 2, %v1429
          %v1431 = vrot.slane %v1423, %v1430
          %vm1432 = vcmp.eq.s32.totalorder %v295, %v1427
          %vm1433 = vcmp.eq.s32.totalorder %v295, %v1431
          %v1434 = vlaneseq
          %v1435 = vshrl.u32 %v1434, 7
          %v1436 = vsub.s32 2, %v1435
          %v1437 = vrot.slane %v282, %v1436
          %v1438 = vlaneseq
          %v1439 = vshrl.u32 %v1438, 7
          %v1440 = vsub.s32 6, %v1439
          %v1441 = vrot.slane %v282, %v1440
          %v1444 = vlaneseq
          %v1445 = vshrl.u32 %v1444, 7
          %v1446 = vsub.s32 2, %v1445
          %v1447 = vrot.slane %v1437, %v1446
          %v1448 = vlaneseq
          %v1449 = vshrl.u32 %v1448, 7
          %v1450 = vsub.s32 2, %v1449
          %v1451 = vrot.slane %v1441, %v1450
          %v1452 = vsel %vm1432, %v1447, 0.0
          %v1453 = vsel %vm1433, %v1451, 0.0
          %v1454 = vadd.f32 %v1414, %v1452
          %v1455 = vadd.f32 %v1415, %v1453
          %v1456 = vld [vmem:[#allocation2] sm:$0xff]
          %v1457 = vld [vmem:[#allocation2 + $0x8] sm:$0xff]
          %v1458 = vld [vmem:[#allocation2 + $0x10] sm:$0xff]
          %v1459 = vld [vmem:[#allocation2 + $0x18] sm:$0xff]
          %v1460 = vld [vmem:[#allocation2 + $0x20] sm:$0xff]
          %v1461 = vld [vmem:[#allocation2 + $0x28] sm:$0xff]
          %v1462 = vld [vmem:[#allocation2 + $0x30] sm:$0xff]
          %v1463 = vld [vmem:[#allocation2 + $0x38] sm:$0xff]
          %v1464 = vmul.f32 %v1456, %v1454
          %v1465 = vmul.f32 %v1457, %v1455
          %v1466 = vmul.f32 %v1458, %v1454
          %v1467 = vmul.f32 %v1459, %v1455
          %v1468 = vmul.f32 %v1460, %v1454
          %v1469 = vmul.f32 %v1461, %v1455
          %v1470 = vmul.f32 %v1462, %v1454
          %v1471 = vmul.f32 %v1463, %v1455
          %v1472 = vlaneseq
          %v1473 = vand.u32 %v1472, 127
          %v1474 = vmul.u32 %v295, 8
          %vm1475 = vcmp.ge.s32.totalorder %v1473, %v1474
          %v1476 = vadd.s32 %v295, 1
          %v1477 = vmul.u32 %v1476, 8
          %vm1478 = vcmp.lt.s32.totalorder %v1473, %v1477
          %vm1479 = vmand %vm1475, %vm1478
          %v1480 = vsel %vm1479, 1, 0
          %v1481 = vcvt.s32.f32 %v1480
          %vm1482 = vcmask 261120
          %v1484 = vsel %vm1482, %v1481, 0
          %1486 = vmatprep.subr.mxu0 %v1465
          %1487 = vmatpush1.msra.mxu0 %v1464
          %1488 = vmatprep.subr.mxu0 %v1467
          %1489 = vmatpush1.msra.mxu0 %v1466
          %1490 = vmatprep.subr.mxu0 %v1469
          %1491 = vmatpush1.msra.mxu0 %v1468
          %1492 = vmatprep.subr.mxu0 %v1471
          %1493 = vmatpush1.msra.mxu0 %v1470
          %1494 = vmatprep.subr.mxu0 0.0
          %1495 = vmatpush1.msra.mxu0 0.0
          %1496 = vmatprep.subr.mxu0 0.0
          %1497 = vmatpush1.msra.mxu0 0.0
          %1498 = vmatprep.subr.mxu0 0.0
          %1499 = vmatpush1.msra.mxu0 0.0
          %1500 = vmatprep.subr.mxu0 0.0
          %1501 = vmatpush1.msra.mxu0 0.0
          %1502 = vmatprep.subr.mxu0 0.0
          %1503 = vmatpush1.msra.mxu0 0.0
          %1504 = vmatprep.subr.mxu0 0.0
          %1505 = vmatpush1.msra.mxu0 0.0
          %1506 = vmatprep.subr.mxu0 0.0
          %1507 = vmatpush1.msra.mxu0 0.0
          %1508 = vmatprep.subr.mxu0 0.0
          %1509 = vmatpush1.msra.mxu0 0.0
          %1510 = vmatprep.subr.mxu0 0.0
          %1511 = vmatpush1.msra.mxu0 0.0
          %1512 = vmatprep.subr.mxu0 0.0
          %1513 = vmatpush1.msra.mxu0 0.0
          %1514 = vmatprep.subr.mxu0 0.0
          %1515 = vmatpush1.msra.mxu0 0.0
          %1516 = vmatprep.subr.mxu0 0.0
          %1517 = vmatpush1.msra.mxu0 0.0
          %1518 = vmatprep.subr.mxu0 0.0
          %1519 = vmatpush1.msra.mxu0 0.0
          %1520 = vmatprep.subr.mxu0 0.0
          %1521 = vmatpush1.msra.mxu0 0.0
          %1522 = vmatprep.subr.mxu0 0.0
          %1523 = vmatpush1.msra.mxu0 0.0
          %1524 = vmatprep.subr.mxu0 0.0
          %1525 = vmatpush1.msra.mxu0 0.0
          %1526 = vmatprep.subr.mxu0 0.0
          %1527 = vmatpush1.msra.mxu0 0.0
          %1528 = vmatprep.subr.mxu0 0.0
          %1529 = vmatpush1.msra.mxu0 0.0
          %1530 = vmatprep.subr.mxu0 0.0
          %1531 = vmatpush1.msra.mxu0 0.0
          %1532 = vmatprep.subr.mxu0 0.0
          %1533 = vmatpush1.msra.mxu0 0.0
          %1534 = vmatprep.subr.mxu0 0.0
          %1535 = vmatpush1.msra.mxu0 0.0
          %1536 = vmatprep.subr.mxu0 0.0
          %1537 = vmatpush1.msra.mxu0 0.0
          %1538 = vmatprep.subr.mxu0 0.0
          %1539 = vmatpush1.msra.mxu0 0.0
          %1540 = vmatprep.subr.mxu0 0.0
          %1541 = vmatpush1.msra.mxu0 0.0
          %1542 = vmatprep.subr.mxu0 0.0
          %1543 = vmatpush1.msra.mxu0 0.0
          %1544 = vmatprep.subr.mxu0 0.0
          %1545 = vmatpush1.msra.mxu0 0.0
          %1546 = vmatprep.subr.mxu0 0.0
          %1547 = vmatpush1.msra.mxu0 0.0
          %1548 = vmatprep.subr.mxu0 0.0
          %1549 = vmatpush1.msra.mxu0 0.0
          %1550 = vmatprep.mubr.f32.mxu0 0.0
          %1551 = vmatmul.mubr.f32.gmra.mrb[0].mxu0 %v1484
          %v1552 = vpop.f32.mrb[0].mxu0
          %v1553 = vadd.f32 0.0, %v1552
          %v1554 = vpop.f32.mrb[0].mxu0
          %v1555 = vadd.f32 0.0, %v1554
          %1556 = vdwg.mxu0
          %v1559 = vcombine.low %v1553, %v1555
          %1561 = vst [vmem:[%s246] sm:$0xff] %v1559
        $region40: #{tpu_custom_call.1} parent=27 // pred_fallthru
          _
        %s1562 = sand.u32 %s129, 1
        %s1563 = scalar_lea.sflag [#allocation7], %s1562
        %s1564 = sand.u32 %s129, 1
        %s1565 = smul.addr %s1564, 8
        %s1566 = scalar_lea.vmem [#allocation8], %s1565
        // Predicated region
        $region41: #{tpu_custom_call.1} parent=27 // pred_check
          %p1567 = pneg %p139
        $region42: #{tpu_custom_call.1} parent=27 // pred_check_branch
          %1569 = sbr.rel (%p1567) target = $region44
        $region43: #{tpu_custom_call.1} parent=27 // pred_region
          %s1570 = smul.u32 2, %s32
          %s1572 = ssub.s32 128, 128
          %1573 = vsyncadd %s1563, %s1572
          %s1574 = smul.addr %s31, 2
          %s1575 = sadd.s32 %s1570, %s1574
          %s1576 = smul.addr %s1575, 64
          %s1577 = scalar_lea.hbm %s3, %s1576
          %s1579 = sshll.u32 %s1566, 4
          %s1580 = int_to_ptr.vmem [resolvable:$true] %s1579
          %1582 = dma.vmem_to_hbm [thread:$0]  %s1580, 128, %s1577, %s1563
        $region44: #{tpu_custom_call.1} parent=27 // pred_fallthru
          _
      $region28: #{tpu_custom_call.1} parent=5 // pred_fallthru
        _
      %p1583 = scmp.le.s32.totalorder 2, %s21
      // Predicated region
      $region45: #{tpu_custom_call.1} parent=5 // pred_check
        %p1584 = pneg %p1583
      $region46: #{tpu_custom_call.1} parent=5 // pred_check_branch
        %1586 = sbr.rel (%p1584) target = $region48
      $region47: #{tpu_custom_call.1} parent=5 // pred_region
        %s1587 = ssub.s32 %s21, 2
        // Predicated region
        $region49: #{tpu_custom_call.1} parent=47 // pred_check
          %p1588 = pneg %p145
        $region50: #{tpu_custom_call.1} parent=47 // pred_check_branch
          %1590 = sbr.rel (%p1588) target = $region52
        $region51: #{tpu_custom_call.1} parent=47 // pred_region
          %s1591 = sand.u32 %s130, 1
          %s1592 = scalar_lea.sflag [#allocation7], %s1591
          %s1593 = sand.u32 %s130, 1
          %s1594 = smul.addr %s1593, 8
          %s1595 = scalar_lea.vmem [#allocation8], %s1594
          %1596 = dma.done %s1592, 128
        $region52: #{tpu_custom_call.1} parent=47 // pred_fallthru
          _
      $region48: #{tpu_custom_call.1} parent=5 // pred_fallthru
        _
    $region6: #{tpu_custom_call.1} parent=1 // loop_footer
      %s25 = sadd.s32 1, %s21
    $region7: #{tpu_custom_call.1} parent=1 // loop_footer_branch
      %20 = sbr.rel target = $region3
    $region8: #{tpu_custom_call.1} parent=1 // loop_exit
      _
    %1597 = vsyncpa [#allocation6], 1
    %s1598 = scalar_lea.sflag [#allocation6], 1
    %1599 = vsyncpa %s1598, 1
    %1600 = vsyncpa [#allocation7], 1
    %s1601 = scalar_lea.sflag [#allocation7], 1
    %1602 = vsyncpa %s1601, 1

</llo_original>
